<compile_context>
chip_gen: v7x
topology: tpu7x:2x2x1
jax: 0.10.0
libtpu: 0.0.40
codegen_flags: <defaults>
</compile_context>

<pallas_src>
import jax
import jax.numpy as jnp
from jax import lax
from jax.experimental import pallas as pl
from jax.experimental.pallas import tpu as pltpu

EPS = 1e-12     # F.normalize default eps
W_CHUNK = 8     # words per pooling chunk (sublane multiple)


def _round_up(x, m):
    return ((x + m - 1) // m) * m


def _vmem_limit(nbytes):
    # Explicit scoped-VMEM limit: block estimate + headroom, clamped so the
    # value is valid on every generation (v7x has only 64 MiB physical VMEM).
    return int(min(max(int(nbytes * 1.5) + (4 << 20), 32 << 20), 56 << 20))


def _l2_normalize(z):
    # z / max(||z||, eps) == z * rsqrt(max(sum(z^2), eps^2))  (EUP rsqrt, no div)
    ss = jnp.sum(z * z, axis=-1, keepdims=True)
    return z * lax.rsqrt(jnp.maximum(ss, EPS * EPS))


def _gated_embedding(x, w0_ref, b0_ref, w1_ref, b1_ref):
    """Gated_Embedding_Unit: Linear -> Context_Gating (glu) -> L2 norm.

    Matmul operands stay in the weights' dtype (f32 or bf16); accumulation and
    all elementwise math are f32.
    """
    y = jnp.dot(x, w0_ref[...], preferred_element_type=jnp.float32) + b0_ref[...]
    g = jnp.dot(y.astype(w1_ref.dtype), w1_ref[...],
                preferred_element_type=jnp.float32) + b1_ref[...]
    z = y * jax.nn.sigmoid(g)          # F.glu(cat(y, g), dim=1)
    return _l2_normalize(z)            # F.normalize(z, p=2, dim=1)


# ---------------------------------------------------------------------------
# Kernel A: video Gated_Embedding_Unit, gridded over the video batch.
# ---------------------------------------------------------------------------
def video_geu_kernel(video_ref, wv0_ref, bv0_ref, wv1_ref, bv1_ref, out_ref):
    z = _gated_embedding(video_ref[...], wv0_ref, bv0_ref, wv1_ref, bv1_ref)
    out_ref[...] = z.astype(out_ref.dtype)


# ---------------------------------------------------------------------------
# Kernel B: Sentence_Maxpool (chunked running max) + text GEU + similarity.
# grid = (text tiles, video tiles); the text embedding is computed once per
# text tile (j == 0) and kept in VMEM scratch across the inner video axis.
# ---------------------------------------------------------------------------
def text_sim_kernel(text_ref,
                    wp_ref, bp_ref,                 # Sentence_Maxpool fc
                    wt0_ref, bt0_ref,               # GU_text fc
                    wt1_ref, bt1_ref,               # GU_text cg fc
                    vembT_ref,                      # (embd, TBV) video emb tile
                    out_ref,                        # (TBT, TBV)
                    temb_ref):                      # VMEM scratch (TBT, embd)
    j = pl.program_id(1)

    @pl.when(j == 0)
    def _():
        tb, n_words, we_dim = text_ref.shape
        embd = wp_ref.shape[1]
        wp = wp_ref[...]
        bp = bp_ref[...]

        # Chunked running max over the word axis: never materializes the full
        # (tb * n_words, embd) activation.  No padded words are ever created,
        # so no masking is needed (the last chunk just has fewer rows).
        pooled = jnp.full((tb, embd), -jnp.inf, jnp.float32)
        for base in range(0, n_words, W_CHUNK):
            size = min(W_CHUNK, n_words - base)
            xc = text_ref[:, base:base + size, :].reshape(tb * size, we_dim)
            hc = jnp.dot(xc, wp, preferred_element_type=jnp.float32) + bp
            hc = jnp.maximum(hc, 0.0)                          # ReLU
            pooled = jnp.maximum(pooled, jnp.max(hc.reshape(tb, size, embd),
                                                 axis=1))

        temb = _gated_embedding(pooled.astype(wt0_ref.dtype),
                                wt0_ref, bt0_ref, wt1_ref, bt1_ref)
        temb_ref[...] = temb.astype(temb_ref.dtype)

    # Similarity: plain NN matmul against the pre-transposed video tile
    # (no per-step transpose / relayout of the grid-invariant video embedding).
    out_ref[...] = jnp.dot(temb_ref[...], vembT_ref[...],
                           preferred_element_type=jnp.float32)


# ---------------------------------------------------------------------------
# Wrapper
# ---------------------------------------------------------------------------
def net_forward(video, text, params, *, compute_dtype=jnp.float32,
                text_tile=128, video_tile=256):
    """Forward of `Net` (mil=0): text_emb @ video_emb.T, shape (Bt, Bv)."""
    Bv, video_dim = video.shape
    Bt, max_words, we_dim = text.shape
    embd = params["wp"].shape[1]

    cdt = jnp.dtype(compute_dtype)
    c = cdt.itemsize

    # ---- tile sizes / padding -------------------------------------------
    TBT = text_tile if Bt >= text_tile else _round_up(Bt, 8)
    Bt_pad = _round_up(Bt, TBT)
    TBV = video_tile if Bv >= video_tile else _round_up(Bv, 128)
    Bv_pad = _round_up(Bv, TBV)      # output lane dim stays a multiple of 128
    # NOTE(v7x): at production shapes make sure Bt_pad // TBT >= 2 (halve
    # text_tile if needed) so the "parallel" text axis splits across both TCs.

    video_p = jnp.pad(video, ((0, Bv_pad - Bv), (0, 0))).astype(cdt)
    text_p = jnp.pad(text, ((0, Bt_pad - Bt), (0, 0), (0, 0))).astype(cdt)

    # Matmul operands in compute_dtype (bf16 on v6e/v7x: full-rate MXU, halves
    # HBM/VMEM for streamed/resident operands); biases stay f32.
    wv0 = params["wv0"].astype(cdt); wv1 = params["wv1"].astype(cdt)
    wp = params["wp"].astype(cdt)
    wt0 = params["wt0"].astype(cdt); wt1 = params["wt1"].astype(cdt)
    bv0, bv1 = params["bv0"], params["bv1"]
    bp, bt0, bt1 = params["bp"], params["bt0"], params["bt1"]

    def run(single_buffer):
        wbuf = 1 if single_buffer else 2

        def const_spec(shape, index_map):
            # Grid-invariant blocks don't need a prefetch buffer.
            if single_buffer:
                return pl.BlockSpec(shape, index_map,
                                    pipeline_mode=pl.Buffered(1))
            return pl.BlockSpec(shape, index_map)

        # ---------------- Kernel A: video embedding -----------------------
        a_bytes = (c * TBV * video_dim * 2
                   + (c * (wv0.size + wv1.size)
                      + 4 * (bv0.size + bv1.size)) * wbuf
                   + c * TBV * embd * 2
                   + 4 * TBV * embd * 4)            # f32 intermediates y,g,z
        a_cost = pl.CostEstimate(
            flops=int(2 * Bv_pad * embd * (video_dim + embd)),
            transcendentals=int(Bv_pad * embd),
            bytes_accessed=int(c * (video_p.size + wv0.size + wv1.size
                                    + Bv_pad * embd)
                               + 4 * (bv0.size + bv1.size)))

        vemb = pl.pallas_call(
            video_geu_kernel,
            out_shape=jax.ShapeDtypeStruct((Bv_pad, embd), cdt),
            grid=(Bv_pad // TBV,),
            in_specs=[
                pl.BlockSpec((TBV, video_dim), lambda i: (i, 0)),
                const_spec(wv0.shape, lambda i: (0, 0)),
                const_spec(bv0.shape, lambda i: (0, 0)),
                const_spec(wv1.shape, lambda i: (0, 0)),
                const_spec(bv1.shape, lambda i: (0, 0)),
            ],
            out_specs=pl.BlockSpec((TBV, embd), lambda i: (i, 0)),
            compiler_params=pltpu.CompilerParams(
                dimension_semantics=("parallel",),
                vmem_limit_bytes=_vmem_limit(a_bytes)),
            cost_estimate=a_cost,
        )(video_p, wv0, bv0, wv1, bv1)
        # TODO(synk): for very large video_dim (>=~4K) on v7x, add a K grid
        # axis with an f32 accumulator instead of keeping wv0 fully resident.

        # One-time transpose of the grid-invariant video embedding so the
        # per-grid-step similarity in Kernel B is a plain NN matmul.
        vembT = jnp.transpose(vemb)                      # (embd, Bv_pad)

        # ---------------- Kernel B: pooling + text GEU + similarity --------
        b_bytes = (c * TBT * max_words * we_dim * 2
                   + (c * (wp.size + wt0.size + wt1.size)
                      + 4 * (bp.size + bt0.size + bt1.size)) * wbuf
                   + c * embd * TBV * 2                  # vembT tile
                   + 4 * TBT * TBV * 2                   # out tile (f32)
                   + c * TBT * embd                      # temb scratch
                   + 4 * TBT * embd * (W_CHUNK + 4))     # chunk h + y,g,z
        b_cost = pl.CostEstimate(
            flops=int(2 * (Bt_pad * max_words * we_dim * embd
                           + 2 * Bt_pad * embd * embd
                           + Bt_pad * embd * Bv_pad)),
            transcendentals=int(Bt_pad * embd),
            bytes_accessed=int(c * (text_p.size + Bv_pad * embd
                                    + wp.size + wt0.size + wt1.size)
                               + 4 * (Bt_pad * Bv_pad + bp.size
                                      + bt0.size + bt1.size)))

        out_pad = pl.pallas_call(
            text_sim_kernel,
            out_shape=jax.ShapeDtypeStruct((Bt_pad, Bv_pad), jnp.float32),
            grid=(Bt_pad // TBT, Bv_pad // TBV),
            in_specs=[
                pl.BlockSpec((TBT, max_words, we_dim), lambda i, j: (i, 0, 0)),
                const_spec(wp.shape, lambda i, j: (0, 0)),
                const_spec(bp.shape, lambda i, j: (0, 0)),
                const_spec(wt0.shape, lambda i, j: (0, 0)),
                const_spec(bt0.shape, lambda i, j: (0, 0)),
                const_spec(wt1.shape, lambda i, j: (0, 0)),
                const_spec(bt1.shape, lambda i, j: (0, 0)),
                pl.BlockSpec((embd, TBV), lambda i, j: (0, j)),
            ],
            out_specs=pl.BlockSpec((TBT, TBV), lambda i, j: (i, j)),
            scratch_shapes=[pltpu.VMEM((TBT, embd), cdt)],
            compiler_params=pltpu.CompilerParams(
                # video axis is the inner "arbitrary" axis: the text GEU result
                # held in scratch is reused across it (pl.when(j == 0)).
                dimension_semantics=("parallel", "arbitrary"),
                vmem_limit_bytes=_vmem_limit(b_bytes)),
            cost_estimate=b_cost,
        )(text_p, wp, bp, wt0, bt0, wt1, bt1, vembT)
        return out_pad

    try:
        out_pad = run(single_buffer=True)
    except Exception:
        # pl.Buffered(1) (single-buffered invariant blocks) not supported on
        # this jax build -> fall back to default double buffering.
        out_pad = run(single_buffer=False)

    return out_pad[:Bt, :Bv]


# ---------------------------------------------------------------------------
# Params + pure-JAX reference
# ---------------------------------------------------------------------------
def init_params(key, we_dim, video_dim, embd_dim):
    ks = jax.random.split(key, 10)

    def lin(k, fan_in, fan_out):
        scale = 1.0 / jnp.sqrt(fan_in)
        return jax.random.uniform(k, (fan_in, fan_out), jnp.float32, -scale, scale)

    def bias(k, fan_in, fan_out):
        scale = 1.0 / jnp.sqrt(fan_in)
        return jax.random.uniform(k, (1, fan_out), jnp.float32, -scale, scale)

    return {
        "wp":  lin(ks[0], we_dim, embd_dim),    "bp":  bias(ks[1], we_dim, embd_dim),
        "wt0": lin(ks[2], embd_dim, embd_dim),  "bt0": bias(ks[3], embd_dim, embd_dim),
        "wt1": lin(ks[4], embd_dim, embd_dim),  "bt1": bias(ks[5], embd_dim, embd_dim),
        "wv0": lin(ks[6], video_dim, embd_dim), "bv0": bias(ks[7], video_dim, embd_dim),
        "wv1": lin(ks[8], embd_dim, embd_dim),  "bv1": bias(ks[9], embd_dim, embd_dim),
    }


def net_reference(video, text, p):
    """Pure-JAX reference mirroring the PyTorch forward (mil=0)."""
    def geu(x, w0, b0, w1, b1):
        y = x @ w0 + b0
        g = y @ w1 + b1
        z = y * jax.nn.sigmoid(g)
        n = jnp.sqrt(jnp.sum(z * z, axis=1, keepdims=True))
        return z / jnp.maximum(n, EPS)
    pooled = jnp.max(
        jnp.maximum(jnp.einsum("bwd,de->bwe", text, p["wp"]) + p["bp"], 0.0),
        axis=1)
    t = geu(pooled, p["wt0"], p["bt0"], p["wt1"], p["bt1"])
    v = geu(video,  p["wv0"], p["bv0"], p["wv1"], p["bv1"])
    return t @ v.T


if __name__ == "__main__":
    # Small shapes consistent with the module's forward (odd batch / word
    # counts exercise the padding and the partial word chunk).
    embd_dim, video_dim, we_dim, max_words = 32, 64, 32, 10
    Bv, Bt = 5, 3

    key = jax.random.PRNGKey(0)
    k_video, k_text, k_params = jax.random.split(key, 3)
    video = jax.random.normal(k_video, (Bv, video_dim), jnp.float32)
    text = jax.random.normal(k_text, (Bt, max_words, we_dim), jnp.float32)
    params = init_params(k_params, we_dim, video_dim, embd_dim)

    ref = net_reference(video, text, params)

    # f32 path (bit-level parity with the reference, tight tolerance).
    out = net_forward(video, text, params)
    out = jax.block_until_ready(out)
    assert out.shape == (Bt, Bv)
    assert jnp.allclose(out, ref, rtol=1e-4, atol=1e-4), "f32 mismatch vs reference"

    # bf16 matmul-operand path (v6e/v7x production setting), loose tolerance.
    out_bf16 = net_forward(video, text, params, compute_dtype=jnp.bfloat16)
    out_bf16 = jax.block_until_ready(out_bf16)
    assert out_bf16.shape == (Bt, Bv)
    assert jnp.allclose(out_bf16, ref, rtol=5e-2, atol=5e-2), "bf16 mismatch vs reference"

    print("KERNEL_OK")
</pallas_src>

<mosaic_0001>
module attributes {stable_mosaic.version = 11 : i64} {
  func.func @video_geu_kernel(%arg0: i32, %arg1: memref<128x64xf32, #tpu.memory_space<vmem>>, %arg2: memref<64x32xf32, #tpu.memory_space<vmem>>, %arg3: memref<1x32xf32, #tpu.memory_space<vmem>>, %arg4: memref<32x32xf32, #tpu.memory_space<vmem>>, %arg5: memref<1x32xf32, #tpu.memory_space<vmem>>, %arg6: memref<128x32xf32, #tpu.memory_space<vmem>>) attributes {dimension_semantics = [#tpu.dimension_semantics<parallel>], iteration_bounds = array<i64: 1>, scalar_prefetch = 0 : i64, scratch_operands = 0 : i64, tpu.core_type = #tpu.core_type<tc>, window_params = [{transform_indices = @transform_0, window_bounds = array<i64: 128, 64>}, {pipeline_mode = #tpu.pipeline_mode<synchronous>, transform_indices = @transform_1, window_bounds = array<i64: 64, 32>}, {pipeline_mode = #tpu.pipeline_mode<synchronous>, transform_indices = @transform_2, window_bounds = array<i64: 1, 32>}, {pipeline_mode = #tpu.pipeline_mode<synchronous>, transform_indices = @transform_3, window_bounds = array<i64: 32, 32>}, {pipeline_mode = #tpu.pipeline_mode<synchronous>, transform_indices = @transform_4, window_bounds = array<i64: 1, 32>}, {transform_indices = @transform_5, window_bounds = array<i64: 128, 32>}]} {
    %c0 = arith.constant 0 : index
    %c0_0 = arith.constant 0 : index
    %0 = vector.load %arg1[%c0, %c0_0] : memref<128x64xf32, #tpu.memory_space<vmem>>, vector<128x64xf32>
    %c0_1 = arith.constant 0 : index
    %c0_2 = arith.constant 0 : index
    %1 = vector.load %arg2[%c0_1, %c0_2] : memref<64x32xf32, #tpu.memory_space<vmem>>, vector<64x32xf32>
    %cst = arith.constant dense<0.000000e+00> : vector<128x32xf32>
    %2 = tpu.matmul %0, %1, %cst {dimension_numbers = #tpu.dot_dimension_numbers<[1], [0], [0], [1], [0, 0, 1, 1], [], []>} : vector<128x64xf32>, vector<64x32xf32>, vector<128x32xf32> -> vector<128x32xf32>
    %c0_3 = arith.constant 0 : index
    %c0_4 = arith.constant 0 : index
    %3 = vector.load %arg3[%c0_3, %c0_4] : memref<1x32xf32, #tpu.memory_space<vmem>>, vector<1x32xf32>
    %4 = vector.broadcast %3 : vector<1x32xf32> to vector<128x32xf32>
    %5 = arith.addf %2, %4 : vector<128x32xf32>
    %c0_5 = arith.constant 0 : index
    %c0_6 = arith.constant 0 : index
    %6 = vector.load %arg4[%c0_5, %c0_6] : memref<32x32xf32, #tpu.memory_space<vmem>>, vector<32x32xf32>
    %cst_7 = arith.constant dense<0.000000e+00> : vector<128x32xf32>
    %7 = tpu.matmul %5, %6, %cst_7 {dimension_numbers = #tpu.dot_dimension_numbers<[1], [0], [0], [1], [0, 0, 1, 1], [], []>} : vector<128x32xf32>, vector<32x32xf32>, vector<128x32xf32> -> vector<128x32xf32>
    %c0_8 = arith.constant 0 : index
    %c0_9 = arith.constant 0 : index
    %8 = vector.load %arg5[%c0_8, %c0_9] : memref<1x32xf32, #tpu.memory_space<vmem>>, vector<1x32xf32>
    %9 = vector.broadcast %8 : vector<1x32xf32> to vector<128x32xf32>
    %10 = arith.addf %7, %9 : vector<128x32xf32>
    %11 = arith.negf %10 : vector<128x32xf32>
    %12 = math.exp %11 : vector<128x32xf32>
    %cst_10 = arith.constant 1.000000e+00 : f32
    %13 = vector.broadcast %cst_10 : f32 to vector<128x32xf32>
    %14 = arith.addf %13, %12 : vector<128x32xf32>
    %15 = arith.divf %13, %14 : vector<128x32xf32>
    %16 = arith.mulf %5, %15 : vector<128x32xf32>
    %17 = arith.mulf %16, %16 : vector<128x32xf32>
    %cst_11 = arith.constant dense<0.000000e+00> : vector<128xf32>
    %18 = vector.multi_reduction <add>, %17, %cst_11 [1] : vector<128x32xf32> to vector<128xf32>
    %19 = vector.shape_cast %18 : vector<128xf32> to vector<128x1xf32>
    %cst_12 = arith.constant 1.000000e-24 : f32
    %20 = vector.broadcast %cst_12 : f32 to vector<128x1xf32>
    %21 = arith.maximumf %19, %20 : vector<128x1xf32>
    %22 = math.rsqrt %21 : vector<128x1xf32>
    %23 = vector.broadcast %22 : vector<128x1xf32> to vector<128x32xf32>
    %24 = arith.mulf %16, %23 : vector<128x32xf32>
    %c0_13 = arith.constant 0 : index
    %c0_14 = arith.constant 0 : index
    %25 = vector.load %arg6[%c0_13, %c0_14] : memref<128x32xf32, #tpu.memory_space<vmem>>, vector<128x32xf32>
    tpu.vector_store %arg6[%c0_13, %c0_14], %24 {strides = array<i32>} : memref<128x32xf32, #tpu.memory_space<vmem>>, vector<128x32xf32>,
    return
  }
  func.func @transform_0(%arg0: i32) -> (i32, i32) {
    %c0_i32 = arith.constant 0 : i32
    %c0_i32_0 = arith.constant 0 : i32
    return %arg0, %c0_i32 : i32, i32
  }
  func.func @transform_1(%arg0: i32) -> (i32, i32) {
    %c0_i32 = arith.constant 0 : i32
    %c0_i32_0 = arith.constant 0 : i32
    %c0_i32_1 = arith.constant 0 : i32
    return %c0_i32, %c0_i32_0 : i32, i32
  }
  func.func @transform_2(%arg0: i32) -> (i32, i32) {
    %c0_i32 = arith.constant 0 : i32
    %c0_i32_0 = arith.constant 0 : i32
    %c0_i32_1 = arith.constant 0 : i32
    return %c0_i32, %c0_i32_0 : i32, i32
  }
  func.func @transform_3(%arg0: i32) -> (i32, i32) {
    %c0_i32 = arith.constant 0 : i32
    %c0_i32_0 = arith.constant 0 : i32
    %c0_i32_1 = arith.constant 0 : i32
    return %c0_i32, %c0_i32_0 : i32, i32
  }
  func.func @transform_4(%arg0: i32) -> (i32, i32) {
    %c0_i32 = arith.constant 0 : i32
    %c0_i32_0 = arith.constant 0 : i32
    %c0_i32_1 = arith.constant 0 : i32
    return %c0_i32, %c0_i32_0 : i32, i32
  }
  func.func @transform_5(%arg0: i32) -> (i32, i32) {
    %c0_i32 = arith.constant 0 : i32
    %c0_i32_0 = arith.constant 0 : i32
    return %arg0, %c0_i32 : i32, i32
  }
}

module attributes {stable_mosaic.version = 11 : i64} {
  func.func @video_geu_kernel(%arg0: i32, %arg1: memref<128x64xf32, #tpu.memory_space<vmem>>, %arg2: memref<64x32xf32, #tpu.memory_space<vmem>>, %arg3: memref<1x32xf32, #tpu.memory_space<vmem>>, %arg4: memref<32x32xf32, #tpu.memory_space<vmem>>, %arg5: memref<1x32xf32, #tpu.memory_space<vmem>>, %arg6: memref<128x32xf32, #tpu.memory_space<vmem>>) attributes {dimension_semantics = [#tpu.dimension_semantics<parallel>], iteration_bounds = array<i64: 1>, scalar_prefetch = 0 : i64, scratch_operands = 0 : i64, tpu.core_type = #tpu.core_type<tc>, window_params = [{transform_indices = @transform_0, window_bounds = array<i64: 128, 64>}, {pipeline_mode = #tpu.pipeline_mode<synchronous>, transform_indices = @transform_1, window_bounds = array<i64: 64, 32>}, {pipeline_mode = #tpu.pipeline_mode<synchronous>, transform_indices = @transform_2, window_bounds = array<i64: 1, 32>}, {pipeline_mode = #tpu.pipeline_mode<synchronous>, transform_indices = @transform_3, window_bounds = array<i64: 32, 32>}, {pipeline_mode = #tpu.pipeline_mode<synchronous>, transform_indices = @transform_4, window_bounds = array<i64: 1, 32>}, {transform_indices = @transform_5, window_bounds = array<i64: 128, 32>}]} {
    %c0 = arith.constant 0 : index
    %c0_0 = arith.constant 0 : index
    %0 = vector.load %arg1[%c0, %c0_0] : memref<128x64xf32, #tpu.memory_space<vmem>>, vector<128x64xf32>
    %c0_1 = arith.constant 0 : index
    %c0_2 = arith.constant 0 : index
    %1 = vector.load %arg2[%c0_1, %c0_2] : memref<64x32xf32, #tpu.memory_space<vmem>>, vector<64x32xf32>
    %cst = arith.constant dense<0.000000e+00> : vector<128x32xf32>
    %2 = tpu.matmul %0, %1, %cst {dimension_numbers = #tpu.dot_dimension_numbers<[1], [0], [0], [1], [0, 0, 1, 1], [], []>} : vector<128x64xf32>, vector<64x32xf32>, vector<128x32xf32> -> vector<128x32xf32>
    %c0_3 = arith.constant 0 : index
    %c0_4 = arith.constant 0 : index
    %3 = vector.load %arg3[%c0_3, %c0_4] : memref<1x32xf32, #tpu.memory_space<vmem>>, vector<1x32xf32>
    %4 = vector.broadcast %3 : vector<1x32xf32> to vector<128x32xf32>
    %5 = arith.addf %2, %4 : vector<128x32xf32>
    %c0_5 = arith.constant 0 : index
    %c0_6 = arith.constant 0 : index
    %6 = vector.load %arg4[%c0_5, %c0_6] : memref<32x32xf32, #tpu.memory_space<vmem>>, vector<32x32xf32>
    %cst_7 = arith.constant dense<0.000000e+00> : vector<128x32xf32>
    %7 = tpu.matmul %5, %6, %cst_7 {dimension_numbers = #tpu.dot_dimension_numbers<[1], [0], [0], [1], [0, 0, 1, 1], [], []>} : vector<128x32xf32>, vector<32x32xf32>, vector<128x32xf32> -> vector<128x32xf32>
    %c0_8 = arith.constant 0 : index
    %c0_9 = arith.constant 0 : index
    %8 = vector.load %arg5[%c0_8, %c0_9] : memref<1x32xf32, #tpu.memory_space<vmem>>, vector<1x32xf32>
    %9 = vector.broadcast %8 : vector<1x32xf32> to vector<128x32xf32>
    %10 = arith.addf %7, %9 : vector<128x32xf32>
    %11 = arith.negf %10 : vector<128x32xf32>
    %12 = math.exp %11 : vector<128x32xf32>
    %cst_10 = arith.constant 1.000000e+00 : f32
    %13 = vector.broadcast %cst_10 : f32 to vector<128x32xf32>
    %14 = arith.addf %13, %12 : vector<128x32xf32>
    %15 = arith.divf %13, %14 : vector<128x32xf32>
    %16 = arith.mulf %5, %15 : vector<128x32xf32>
    %17 = arith.mulf %16, %16 : vector<128x32xf32>
    %cst_11 = arith.constant dense<0.000000e+00> : vector<128xf32>
    %18 = vector.multi_reduction <add>, %17, %cst_11 [1] : vector<128x32xf32> to vector<128xf32>
    %19 = vector.shape_cast %18 : vector<128xf32> to vector<128x1xf32>
    %cst_12 = arith.constant 1.000000e-24 : f32
    %20 = vector.broadcast %cst_12 : f32 to vector<128x1xf32>
    %21 = arith.maximumf %19, %20 : vector<128x1xf32>
    %22 = math.rsqrt %21 : vector<128x1xf32>
    %23 = vector.broadcast %22 : vector<128x1xf32> to vector<128x32xf32>
    %24 = arith.mulf %16, %23 : vector<128x32xf32>
    %c0_13 = arith.constant 0 : index
    %c0_14 = arith.constant 0 : index
    %25 = vector.load %arg6[%c0_13, %c0_14] : memref<128x32xf32, #tpu.memory_space<vmem>>, vector<128x32xf32>
    tpu.vector_store %arg6[%c0_13, %c0_14], %24 {strides = array<i32>} : memref<128x32xf32, #tpu.memory_space<vmem>>, vector<128x32xf32>,
    return
  }
  func.func @transform_0(%arg0: i32) -> (i32, i32) {
    %c0_i32 = arith.constant 0 : i32
    %c0_i32_0 = arith.constant 0 : i32
    return %arg0, %c0_i32 : i32, i32
  }
  func.func @transform_1(%arg0: i32) -> (i32, i32) {
    %c0_i32 = arith.constant 0 : i32
    %c0_i32_0 = arith.constant 0 : i32
    %c0_i32_1 = arith.constant 0 : i32
    return %c0_i32, %c0_i32_0 : i32, i32
  }
  func.func @transform_2(%arg0: i32) -> (i32, i32) {
    %c0_i32 = arith.constant 0 : i32
    %c0_i32_0 = arith.constant 0 : i32
    %c0_i32_1 = arith.constant 0 : i32
    return %c0_i32, %c0_i32_0 : i32, i32
  }
  func.func @transform_3(%arg0: i32) -> (i32, i32) {
    %c0_i32 = arith.constant 0 : i32
    %c0_i32_0 = arith.constant 0 : i32
    %c0_i32_1 = arith.constant 0 : i32
    return %c0_i32, %c0_i32_0 : i32, i32
  }
  func.func @transform_4(%arg0: i32) -> (i32, i32) {
    %c0_i32 = arith.constant 0 : i32
    %c0_i32_0 = arith.constant 0 : i32
    %c0_i32_1 = arith.constant 0 : i32
    return %c0_i32, %c0_i32_0 : i32, i32
  }
  func.func @transform_5(%arg0: i32) -> (i32, i32) {
    %c0_i32 = arith.constant 0 : i32
    %c0_i32_0 = arith.constant 0 : i32
    return %arg0, %c0_i32 : i32, i32
  }
}

</mosaic_0001>

<llo_original>
// kernel: tpu_custom_call.1
$region0: #{tpu_custom_call.1}
  #allocation0 [shape = 'u32[]', space=smem, size = 0x4, offset = 0x4, fixed_abs, tag = 'smem constant byte address 0x4 - core index']
  #allocation1 [shape = 'u32[144,128]{1,0:T(1,128)}', space=vmem, size = 0x12000, scoped, tag = 'internal scratch']
  %s0 = inlined_call_operand.vmem [shape: f32[128,64], index: 0, kind: input, shape index: {}]
  %s1 = inlined_call_operand.vmem [shape: f32[64,32], index: 1, kind: input, shape index: {}]
  %s2 = inlined_call_operand.vmem [shape: f32[1,32], index: 2, kind: input, shape index: {}]
  %s3 = inlined_call_operand.vmem [shape: f32[32,32], index: 3, kind: input, shape index: {}]
  %s4 = inlined_call_operand.vmem [shape: f32[1,32], index: 4, kind: input, shape index: {}]
  %s5 = inlined_call_operand.vmem [shape: f32[128,32], index: 5, kind: output, shape index: {}]
  %s6 = sld [smem:[#allocation0]]
  $region30: #{tpu_custom_call.1} parent=0
    _
  %s8 = ssub.s32 1, %s6
  %s9 = scalar_select 0, %s8, %s6
  // Predicated region
  $region2: #{tpu_custom_call.1} parent=0 // pred_check
    _
  $region3: #{tpu_custom_call.1} parent=0 // pred_check_branch
    %11 = sbr.rel (0) target = $region5
  $region4: #{tpu_custom_call.1} parent=0 // pred_region
    _
  $region5: #{tpu_custom_call.1} parent=0 // pred_fallthru
    _
  // Predicated region
  $region6: #{tpu_custom_call.1} parent=0 // pred_check
    _
  $region7: #{tpu_custom_call.1} parent=0 // pred_check_branch
    %13 = sbr.rel (0) target = $region9
  $region8: #{tpu_custom_call.1} parent=0 // pred_region
    _
  $region9: #{tpu_custom_call.1} parent=0 // pred_fallthru
    _
  // Predicated region
  $region10: #{tpu_custom_call.1} parent=0 // pred_check
    _
  $region11: #{tpu_custom_call.1} parent=0 // pred_check_branch
    %15 = sbr.rel (0) target = $region13
  $region12: #{tpu_custom_call.1} parent=0 // pred_region
    _
  $region13: #{tpu_custom_call.1} parent=0 // pred_fallthru
    _
  // Predicated region
  $region14: #{tpu_custom_call.1} parent=0 // pred_check
    _
  $region15: #{tpu_custom_call.1} parent=0 // pred_check_branch
    %17 = sbr.rel (0) target = $region17
  $region16: #{tpu_custom_call.1} parent=0 // pred_region
    _
  $region17: #{tpu_custom_call.1} parent=0 // pred_fallthru
    _
  // Predicated region
  $region18: #{tpu_custom_call.1} parent=0 // pred_check
    _
  $region19: #{tpu_custom_call.1} parent=0 // pred_check_branch
    %19 = sbr.rel (0) target = $region21
  $region20: #{tpu_custom_call.1} parent=0 // pred_region
    _
  $region21: #{tpu_custom_call.1} parent=0 // pred_fallthru
    _
  %v20 = vld [vmem:[%s0] sm:$0xff]
  %v21 = vld [vmem:[%s0 + $0x8] sm:$0xff]
  %v22 = vld [vmem:[%s0 + $0x10] sm:$0xff]
  %v23 = vld [vmem:[%s0 + $0x18] sm:$0xff]
  %v24 = vld [vmem:[%s0 + $0x20] sm:$0xff]
  %v25 = vld [vmem:[%s0 + $0x28] sm:$0xff]
  %v26 = vld [vmem:[%s0 + $0x30] sm:$0xff]
  %v27 = vld [vmem:[%s0 + $0x38] sm:$0xff]
  %v28 = vld [vmem:[%s0 + $0x40] sm:$0xff]
  %v29 = vld [vmem:[%s0 + $0x48] sm:$0xff]
  %v30 = vld [vmem:[%s0 + $0x50] sm:$0xff]
  %v31 = vld [vmem:[%s0 + $0x58] sm:$0xff]
  %v32 = vld [vmem:[%s0 + $0x60] sm:$0xff]
  %v33 = vld [vmem:[%s0 + $0x68] sm:$0xff]
  %v34 = vld [vmem:[%s0 + $0x70] sm:$0xff]
  %v35 = vld [vmem:[%s0 + $0x78] sm:$0xff]
  %v36 = vld [vmem:[%s1] sm:$0xff]
  %v37 = vld [vmem:[%s1 + $0x8] sm:$0xff]
  %v38 = vld [vmem:[%s1 + $0x10] sm:$0xff]
  %v39 = vld [vmem:[%s1 + $0x18] sm:$0xff]
  %v40 = vld [vmem:[%s1 + $0x20] sm:$0xff]
  %v41 = vld [vmem:[%s1 + $0x28] sm:$0xff]
  %v42 = vld [vmem:[%s1 + $0x30] sm:$0xff]
  %v43 = vld [vmem:[%s1 + $0x38] sm:$0xff]
  %v44 = vld [vmem:[%s2] sm:$0x1]
  %v46 = vlaneseq
  %v47 = vshrl.u32 %v46, 7
  %v48 = vsub.s32 0, %v47
  %v49 = vrot.slane %v44, %v48
  %vm51 = vcmask 523264
  %v53 = vsel %vm51, %v20, 0
  %v56 = vsel %vm51, %v21, 0
  %v59 = vsel %vm51, %v22, 0
  %v62 = vsel %vm51, %v23, 0
  %v65 = vsel %vm51, %v24, 0
  %v68 = vsel %vm51, %v25, 0
  %v71 = vsel %vm51, %v26, 0
  %v74 = vsel %vm51, %v27, 0
  %v77 = vsel %vm51, %v28, 0
  %v80 = vsel %vm51, %v29, 0
  %v83 = vsel %vm51, %v30, 0
  %v86 = vsel %vm51, %v31, 0
  %v89 = vsel %vm51, %v32, 0
  %v92 = vsel %vm51, %v33, 0
  %v95 = vsel %vm51, %v34, 0
  %v98 = vsel %vm51, %v35, 0
  %100 = vmatprep.subr.mxu0 0.0
  %101 = vmatpush1.msra.mxu0 %v36
  %102 = vmatprep.subr.mxu0 0.0
  %103 = vmatpush1.msra.mxu0 %v37
  %104 = vmatprep.subr.mxu0 0.0
  %105 = vmatpush1.msra.mxu0 %v38
  %106 = vmatprep.subr.mxu0 0.0
  %107 = vmatpush1.msra.mxu0 %v39
  %108 = vmatprep.subr.mxu0 0.0
  %109 = vmatpush1.msra.mxu0 %v40
  %110 = vmatprep.subr.mxu0 0.0
  %111 = vmatpush1.msra.mxu0 %v41
  %112 = vmatprep.subr.mxu0 0.0
  %113 = vmatpush1.msra.mxu0 %v42
  %114 = vmatprep.subr.mxu0 0.0
  %115 = vmatpush1.msra.mxu0 %v43
  %116 = vmatprep.subr.mxu0 0.0
  %117 = vmatpush1.msra.mxu0 0.0
  %118 = vmatprep.subr.mxu0 0.0
  %119 = vmatpush1.msra.mxu0 0.0
  %120 = vmatprep.subr.mxu0 0.0
  %121 = vmatpush1.msra.mxu0 0.0
  %122 = vmatprep.subr.mxu0 0.0
  %123 = vmatpush1.msra.mxu0 0.0
  %124 = vmatprep.subr.mxu0 0.0
  %125 = vmatpush1.msra.mxu0 0.0
  %126 = vmatprep.subr.mxu0 0.0
  %127 = vmatpush1.msra.mxu0 0.0
  %128 = vmatprep.subr.mxu0 0.0
  %129 = vmatpush1.msra.mxu0 0.0
  %130 = vmatprep.subr.mxu0 0.0
  %131 = vmatpush1.msra.mxu0 0.0
  %132 = vmatprep.subr.mxu0 0.0
  %133 = vmatpush1.msra.mxu0 0.0
  %134 = vmatprep.subr.mxu0 0.0
  %135 = vmatpush1.msra.mxu0 0.0
  %136 = vmatprep.subr.mxu0 0.0
  %137 = vmatpush1.msra.mxu0 0.0
  %138 = vmatprep.subr.mxu0 0.0
  %139 = vmatpush1.msra.mxu0 0.0
  %140 = vmatprep.subr.mxu0 0.0
  %141 = vmatpush1.msra.mxu0 0.0
  %142 = vmatprep.subr.mxu0 0.0
  %143 = vmatpush1.msra.mxu0 0.0
  %144 = vmatprep.subr.mxu0 0.0
  %145 = vmatpush1.msra.mxu0 0.0
  %146 = vmatprep.subr.mxu0 0.0
  %147 = vmatpush1.msra.mxu0 0.0
  %148 = vmatprep.subr.mxu0 0.0
  %149 = vmatpush1.msra.mxu0 0.0
  %150 = vmatprep.subr.mxu0 0.0
  %151 = vmatpush1.msra.mxu0 0.0
  %152 = vmatprep.subr.mxu0 0.0
  %153 = vmatpush1.msra.mxu0 0.0
  %154 = vmatprep.subr.mxu0 0.0
  %155 = vmatpush1.msra.mxu0 0.0
  %156 = vmatprep.subr.mxu0 0.0
  %157 = vmatpush1.msra.mxu0 0.0
  %158 = vmatprep.subr.mxu0 0.0
  %159 = vmatpush1.msra.mxu0 0.0
  %160 = vmatprep.subr.mxu0 0.0
  %161 = vmatpush1.msra.mxu0 0.0
  %162 = vmatprep.subr.mxu0 0.0
  %163 = vmatpush1.msra.mxu0 0.0
  %164 = vmatprep.mubr.f32.mxu0 0.0
  %165 = vmatmul.mubr.f32.gmra.mrb[0].mxu0 %v53
  %v166 = vpop.f32.mrb[0].mxu0
  %v167 = vadd.f32 %v49, %v166
  %v168 = vpop.f32.mrb[0].mxu0
  %169 = vmatprep.mubr.f32.mxu0 0.0
  %170 = vmatmul.mubr.f32.gmra.mrb[0].mxu0 %v56
  %v171 = vpop.f32.mrb[0].mxu0
  %v172 = vadd.f32 %v49, %v171
  %v173 = vpop.f32.mrb[0].mxu0
  %174 = vmatprep.mubr.f32.mxu0 0.0
  %175 = vmatmul.mubr.f32.gmra.mrb[0].mxu0 %v59
  %v176 = vpop.f32.mrb[0].mxu0
  %v177 = vadd.f32 %v49, %v176
  %v178 = vpop.f32.mrb[0].mxu0
  %179 = vmatprep.mubr.f32.mxu0 0.0
  %180 = vmatmul.mubr.f32.gmra.mrb[0].mxu0 %v62
  %v181 = vpop.f32.mrb[0].mxu0
  %v182 = vadd.f32 %v49, %v181
  %v183 = vpop.f32.mrb[0].mxu0
  %184 = vmatprep.mubr.f32.mxu0 0.0
  %185 = vmatmul.mubr.f32.gmra.mrb[0].mxu0 %v65
  %v186 = vpop.f32.mrb[0].mxu0
  %v187 = vadd.f32 %v49, %v186
  %v188 = vpop.f32.mrb[0].mxu0
  %189 = vmatprep.mubr.f32.mxu0 0.0
  %190 = vmatmul.mubr.f32.gmra.mrb[0].mxu0 %v68
  %v191 = vpop.f32.mrb[0].mxu0
  %v192 = vadd.f32 %v49, %v191
  %v193 = vpop.f32.mrb[0].mxu0
  %194 = vmatprep.mubr.f32.mxu0 0.0
  %195 = vmatmul.mubr.f32.gmra.mrb[0].mxu0 %v71
  %v196 = vpop.f32.mrb[0].mxu0
  %v197 = vadd.f32 %v49, %v196
  %v198 = vpop.f32.mrb[0].mxu0
  %199 = vmatprep.mubr.f32.mxu0 0.0
  %200 = vmatmul.mubr.f32.gmra.mrb[0].mxu0 %v74
  %v201 = vpop.f32.mrb[0].mxu0
  %v202 = vadd.f32 %v49, %v201
  %v203 = vpop.f32.mrb[0].mxu0
  %204 = vmatprep.mubr.f32.mxu0 0.0
  %205 = vmatmul.mubr.f32.gmra.mrb[0].mxu0 %v77
  %v206 = vpop.f32.mrb[0].mxu0
  %v207 = vadd.f32 %v49, %v206
  %v208 = vpop.f32.mrb[0].mxu0
  %209 = vmatprep.mubr.f32.mxu0 0.0
  %210 = vmatmul.mubr.f32.gmra.mrb[0].mxu0 %v80
  %v211 = vpop.f32.mrb[0].mxu0
  %v212 = vadd.f32 %v49, %v211
  %v213 = vpop.f32.mrb[0].mxu0
  %214 = vmatprep.mubr.f32.mxu0 0.0
  %215 = vmatmul.mubr.f32.gmra.mrb[0].mxu0 %v83
  %v216 = vpop.f32.mrb[0].mxu0
  %v217 = vadd.f32 %v49, %v216
  %v218 = vpop.f32.mrb[0].mxu0
  %219 = vmatprep.mubr.f32.mxu0 0.0
  %220 = vmatmul.mubr.f32.gmra.mrb[0].mxu0 %v86
  %v221 = vpop.f32.mrb[0].mxu0
  %v222 = vadd.f32 %v49, %v221
  %v223 = vpop.f32.mrb[0].mxu0
  %224 = vmatprep.mubr.f32.mxu0 0.0
  %225 = vmatmul.mubr.f32.gmra.mrb[0].mxu0 %v89
  %v226 = vpop.f32.mrb[0].mxu0
  %v227 = vadd.f32 %v49, %v226
  %v228 = vpop.f32.mrb[0].mxu0
  %229 = vmatprep.mubr.f32.mxu0 0.0
  %230 = vmatmul.mubr.f32.gmra.mrb[0].mxu0 %v92
  %v231 = vpop.f32.mrb[0].mxu0
  %v232 = vadd.f32 %v49, %v231
  %v233 = vpop.f32.mrb[0].mxu0
  %234 = vmatprep.mubr.f32.mxu0 0.0
  %235 = vmatmul.mubr.f32.gmra.mrb[0].mxu0 %v95
  %v236 = vpop.f32.mrb[0].mxu0
  %v237 = vadd.f32 %v49, %v236
  %v238 = vpop.f32.mrb[0].mxu0
  %239 = vmatprep.mubr.f32.mxu0 0.0
  %240 = vmatmul.mubr.f32.gmra.mrb[0].mxu0 %v98
  %v241 = vpop.f32.mrb[0].mxu0
  %v242 = vadd.f32 %v49, %v241
  %v243 = vpop.f32.mrb[0].mxu0
  %244 = vdwg.mxu0
  %v245 = vld [vmem:[%s3] sm:$0xff]
  %v246 = vld [vmem:[%s3 + $0x8] sm:$0xff]
  %v247 = vld [vmem:[%s3 + $0x10] sm:$0xff]
  %v248 = vld [vmem:[%s3 + $0x18] sm:$0xff]
  %v249 = vld [vmem:[%s4] sm:$0x1]
  %v251 = vlaneseq
  %v252 = vshrl.u32 %v251, 7
  %v253 = vsub.s32 0, %v252
  %v254 = vrot.slane %v249, %v253
  %vm256 = vcmask 261120
  %v258 = vsel %vm256, %v167, 0
  %v261 = vsel %vm256, %v172, 0
  %v264 = vsel %vm256, %v177, 0
  %v267 = vsel %vm256, %v182, 0
  %v270 = vsel %vm256, %v187, 0
  %v273 = vsel %vm256, %v192, 0
  %v276 = vsel %vm256, %v197, 0
  %v279 = vsel %vm256, %v202, 0
  %v282 = vsel %vm256, %v207, 0
  %v285 = vsel %vm256, %v212, 0
  %v288 = vsel %vm256, %v217, 0
  %v291 = vsel %vm256, %v222, 0
  %v294 = vsel %vm256, %v227, 0
  %v297 = vsel %vm256, %v232, 0
  %v300 = vsel %vm256, %v237, 0
  %v303 = vsel %vm256, %v242, 0
  %305 = vmatprep.subr.mxu0 0.0
  %306 = vmatpush1.msra.mxu0 %v245
  %307 = vmatprep.subr.mxu0 0.0
  %308 = vmatpush1.msra.mxu0 %v246
  %309 = vmatprep.subr.mxu0 0.0
  %310 = vmatpush1.msra.mxu0 %v247
  %311 = vmatprep.subr.mxu0 0.0
  %312 = vmatpush1.msra.mxu0 %v248
  %313 = vmatprep.subr.mxu0 0.0
  %314 = vmatpush1.msra.mxu0 0.0
  %315 = vmatprep.subr.mxu0 0.0
  %316 = vmatpush1.msra.mxu0 0.0
  %317 = vmatprep.subr.mxu0 0.0
  %318 = vmatpush1.msra.mxu0 0.0
  %319 = vmatprep.subr.mxu0 0.0
  %320 = vmatpush1.msra.mxu0 0.0
  %321 = vmatprep.subr.mxu0 0.0
  %322 = vmatpush1.msra.mxu0 0.0
  %323 = vmatprep.subr.mxu0 0.0
  %324 = vmatpush1.msra.mxu0 0.0
  %325 = vmatprep.subr.mxu0 0.0
  %326 = vmatpush1.msra.mxu0 0.0
  %327 = vmatprep.subr.mxu0 0.0
  %328 = vmatpush1.msra.mxu0 0.0
  %329 = vmatprep.subr.mxu0 0.0
  %330 = vmatpush1.msra.mxu0 0.0
  %331 = vmatprep.subr.mxu0 0.0
  %332 = vmatpush1.msra.mxu0 0.0
  %333 = vmatprep.subr.mxu0 0.0
  %334 = vmatpush1.msra.mxu0 0.0
  %335 = vmatprep.subr.mxu0 0.0
  %336 = vmatpush1.msra.mxu0 0.0
  %337 = vmatprep.subr.mxu0 0.0
  %338 = vmatpush1.msra.mxu0 0.0
  %339 = vmatprep.subr.mxu0 0.0
  %340 = vmatpush1.msra.mxu0 0.0
  %341 = vmatprep.subr.mxu0 0.0
  %342 = vmatpush1.msra.mxu0 0.0
  %343 = vmatprep.subr.mxu0 0.0
  %344 = vmatpush1.msra.mxu0 0.0
  %345 = vmatprep.subr.mxu0 0.0
  %346 = vmatpush1.msra.mxu0 0.0
  %347 = vmatprep.subr.mxu0 0.0
  %348 = vmatpush1.msra.mxu0 0.0
  %349 = vmatprep.subr.mxu0 0.0
  %350 = vmatpush1.msra.mxu0 0.0
  %351 = vmatprep.subr.mxu0 0.0
  %352 = vmatpush1.msra.mxu0 0.0
  %353 = vmatprep.subr.mxu0 0.0
  %354 = vmatpush1.msra.mxu0 0.0
  %355 = vmatprep.subr.mxu0 0.0
  %356 = vmatpush1.msra.mxu0 0.0
  %357 = vmatprep.subr.mxu0 0.0
  %358 = vmatpush1.msra.mxu0 0.0
  %359 = vmatprep.subr.mxu0 0.0
  %360 = vmatpush1.msra.mxu0 0.0
  %361 = vmatprep.subr.mxu0 0.0
  %362 = vmatpush1.msra.mxu0 0.0
  %363 = vmatprep.subr.mxu0 0.0
  %364 = vmatpush1.msra.mxu0 0.0
  %365 = vmatprep.subr.mxu0 0.0
  %366 = vmatpush1.msra.mxu0 0.0
  %367 = vmatprep.subr.mxu0 0.0
  %368 = vmatpush1.msra.mxu0 0.0
  %369 = vmatprep.mubr.f32.mxu0 0.0
  %370 = vmatmul.mubr.f32.gmra.mrb[0].mxu0 %v258
  %v371 = vpop.f32.mrb[0].mxu0
  %v372 = vadd.f32 %v254, %v371
  %v373 = vpop.f32.mrb[0].mxu0
  %374 = vmatprep.mubr.f32.mxu0 0.0
  %375 = vmatmul.mubr.f32.gmra.mrb[0].mxu0 %v261
  %v376 = vpop.f32.mrb[0].mxu0
  %v377 = vadd.f32 %v254, %v376
  %v378 = vpop.f32.mrb[0].mxu0
  %379 = vmatprep.mubr.f32.mxu0 0.0
  %380 = vmatmul.mubr.f32.gmra.mrb[0].mxu0 %v264
  %v381 = vpop.f32.mrb[0].mxu0
  %v382 = vadd.f32 %v254, %v381
  %v383 = vpop.f32.mrb[0].mxu0
  %384 = vmatprep.mubr.f32.mxu0 0.0
  %385 = vmatmul.mubr.f32.gmra.mrb[0].mxu0 %v267
  %v386 = vpop.f32.mrb[0].mxu0
  %v387 = vadd.f32 %v254, %v386
  %v388 = vpop.f32.mrb[0].mxu0
  %389 = vmatprep.mubr.f32.mxu0 0.0
  %390 = vmatmul.mubr.f32.gmra.mrb[0].mxu0 %v270
  %v391 = vpop.f32.mrb[0].mxu0
  %v392 = vadd.f32 %v254, %v391
  %v393 = vpop.f32.mrb[0].mxu0
  %394 = vmatprep.mubr.f32.mxu0 0.0
  %395 = vmatmul.mubr.f32.gmra.mrb[0].mxu0 %v273
  %v396 = vpop.f32.mrb[0].mxu0
  %v397 = vadd.f32 %v254, %v396
  %v398 = vpop.f32.mrb[0].mxu0
  %399 = vmatprep.mubr.f32.mxu0 0.0
  %400 = vmatmul.mubr.f32.gmra.mrb[0].mxu0 %v276
  %v401 = vpop.f32.mrb[0].mxu0
  %v402 = vadd.f32 %v254, %v401
  %v403 = vpop.f32.mrb[0].mxu0
  %404 = vmatprep.mubr.f32.mxu0 0.0
  %405 = vmatmul.mubr.f32.gmra.mrb[0].mxu0 %v279
  %v406 = vpop.f32.mrb[0].mxu0
  %v407 = vadd.f32 %v254, %v406
  %v408 = vpop.f32.mrb[0].mxu0
  %409 = vmatprep.mubr.f32.mxu0 0.0
  %410 = vmatmul.mubr.f32.gmra.mrb[0].mxu0 %v282
  %v411 = vpop.f32.mrb[0].mxu0
  %v412 = vadd.f32 %v254, %v411
  %v413 = vpop.f32.mrb[0].mxu0
  %414 = vmatprep.mubr.f32.mxu0 0.0
  %415 = vmatmul.mubr.f32.gmra.mrb[0].mxu0 %v285
  %v416 = vpop.f32.mrb[0].mxu0
  %v417 = vadd.f32 %v254, %v416
  %v418 = vpop.f32.mrb[0].mxu0
  %419 = vmatprep.mubr.f32.mxu0 0.0
  %420 = vmatmul.mubr.f32.gmra.mrb[0].mxu0 %v288
  %v421 = vpop.f32.mrb[0].mxu0
  %v422 = vadd.f32 %v254, %v421
  %v423 = vpop.f32.mrb[0].mxu0
  %424 = vmatprep.mubr.f32.mxu0 0.0
  %425 = vmatmul.mubr.f32.gmra.mrb[0].mxu0 %v291
  %v426 = vpop.f32.mrb[0].mxu0
  %v427 = vadd.f32 %v254, %v426
  %v428 = vpop.f32.mrb[0].mxu0
  %429 = vmatprep.mubr.f32.mxu0 0.0
  %430 = vmatmul.mubr.f32.gmra.mrb[0].mxu0 %v294
  %v431 = vpop.f32.mrb[0].mxu0
  %v432 = vadd.f32 %v254, %v431
  %v433 = vpop.f32.mrb[0].mxu0
  %434 = vmatprep.mubr.f32.mxu0 0.0
  %435 = vmatmul.mubr.f32.gmra.mrb[0].mxu0 %v297
  %v436 = vpop.f32.mrb[0].mxu0
  %v437 = vadd.f32 %v254, %v436
  %v438 = vpop.f32.mrb[0].mxu0
  %439 = vmatprep.mubr.f32.mxu0 0.0
  %440 = vmatmul.mubr.f32.gmra.mrb[0].mxu0 %v300
  %v441 = vpop.f32.mrb[0].mxu0
  %v442 = vadd.f32 %v254, %v441
  %v443 = vpop.f32.mrb[0].mxu0
  %444 = vmatprep.mubr.f32.mxu0 0.0
  %445 = vmatmul.mubr.f32.gmra.mrb[0].mxu0 %v303
  %v446 = vpop.f32.mrb[0].mxu0
  %v447 = vadd.f32 %v254, %v446
  %v448 = vpop.f32.mrb[0].mxu0
  %449 = vdwg.mxu0
  %v450 = vxor.u32 %v372, 2147483648
  %v451 = vxor.u32 %v377, 2147483648
  %v452 = vxor.u32 %v382, 2147483648
  %v453 = vxor.u32 %v387, 2147483648
  %v454 = vxor.u32 %v392, 2147483648
  %v455 = vxor.u32 %v397, 2147483648
  %v456 = vxor.u32 %v402, 2147483648
  %v457 = vxor.u32 %v407, 2147483648
  %v458 = vxor.u32 %v412, 2147483648
  %v459 = vxor.u32 %v417, 2147483648
  %v460 = vxor.u32 %v422, 2147483648
  %v461 = vxor.u32 %v427, 2147483648
  %v462 = vxor.u32 %v432, 2147483648
  %v463 = vxor.u32 %v437, 2147483648
  %v464 = vxor.u32 %v442, 2147483648
  %v465 = vxor.u32 %v447, 2147483648
  %v466 = vmul.f32 %v450, 1.442695
  %v467 = vpow.pop %v466
  %v468 = vmul.f32 %v451, 1.442695
  %v469 = vpow.pop %v468
  %v470 = vmul.f32 %v452, 1.442695
  %v471 = vpow.pop %v470
  %v472 = vmul.f32 %v453, 1.442695
  %v473 = vpow.pop %v472
  %v474 = vmul.f32 %v454, 1.442695
  %v475 = vpow.pop %v474
  %v476 = vmul.f32 %v455, 1.442695
  %v477 = vpow.pop %v476
  %v478 = vmul.f32 %v456, 1.442695
  %v479 = vpow.pop %v478
  %v480 = vmul.f32 %v457, 1.442695
  %v481 = vpow.pop %v480
  %v482 = vmul.f32 %v458, 1.442695
  %v483 = vpow.pop %v482
  %v484 = vmul.f32 %v459, 1.442695
  %v485 = vpow.pop %v484
  %v486 = vmul.f32 %v460, 1.442695
  %v487 = vpow.pop %v486
  %v488 = vmul.f32 %v461, 1.442695
  %v489 = vpow.pop %v488
  %v490 = vmul.f32 %v462, 1.442695
  %v491 = vpow.pop %v490
  %v492 = vmul.f32 %v463, 1.442695
  %v493 = vpow.pop %v492
  %v494 = vmul.f32 %v464, 1.442695
  %v495 = vpow.pop %v494
  %v496 = vmul.f32 %v465, 1.442695
  %v497 = vpow.pop %v496
  %v498 = vadd.f32 %v467, 1.0
  %v499 = vadd.f32 %v469, 1.0
  %v500 = vadd.f32 %v471, 1.0
  %v501 = vadd.f32 %v473, 1.0
  %v502 = vadd.f32 %v475, 1.0
  %v503 = vadd.f32 %v477, 1.0
  %v504 = vadd.f32 %v479, 1.0
  %v505 = vadd.f32 %v481, 1.0
  %v506 = vadd.f32 %v483, 1.0
  %v507 = vadd.f32 %v485, 1.0
  %v508 = vadd.f32 %v487, 1.0
  %v509 = vadd.f32 %v489, 1.0
  %v510 = vadd.f32 %v491, 1.0
  %v511 = vadd.f32 %v493, 1.0
  %v512 = vadd.f32 %v495, 1.0
  %v513 = vadd.f32 %v497, 1.0
  %v514 = vrcp.pop %v498
  %v515 = vmul.f32 1.0, %v514
  %v516 = vrcp.pop %v499
  %v517 = vmul.f32 1.0, %v516
  %v518 = vrcp.pop %v500
  %v519 = vmul.f32 1.0, %v518
  %v520 = vrcp.pop %v501
  %v521 = vmul.f32 1.0, %v520
  %v522 = vrcp.pop %v502
  %v523 = vmul.f32 1.0, %v522
  %v524 = vrcp.pop %v503
  %v525 = vmul.f32 1.0, %v524
  %v526 = vrcp.pop %v504
  %v527 = vmul.f32 1.0, %v526
  %v528 = vrcp.pop %v505
  %v529 = vmul.f32 1.0, %v528
  %v530 = vrcp.pop %v506
  %v531 = vmul.f32 1.0, %v530
  %v532 = vrcp.pop %v507
  %v533 = vmul.f32 1.0, %v532
  %v534 = vrcp.pop %v508
  %v535 = vmul.f32 1.0, %v534
  %v536 = vrcp.pop %v509
  %v537 = vmul.f32 1.0, %v536
  %v538 = vrcp.pop %v510
  %v539 = vmul.f32 1.0, %v538
  %v540 = vrcp.pop %v511
  %v541 = vmul.f32 1.0, %v540
  %v542 = vrcp.pop %v512
  %v543 = vmul.f32 1.0, %v542
  %v544 = vrcp.pop %v513
  %v545 = vmul.f32 1.0, %v544
  %v546 = vmul.f32 %v167, %v515
  %v547 = vmul.f32 %v172, %v517
  %v548 = vmul.f32 %v177, %v519
  %v549 = vmul.f32 %v182, %v521
  %v550 = vmul.f32 %v187, %v523
  %v551 = vmul.f32 %v192, %v525
  %v552 = vmul.f32 %v197, %v527
  %v553 = vmul.f32 %v202, %v529
  %v554 = vmul.f32 %v207, %v531
  %v555 = vmul.f32 %v212, %v533
  %v556 = vmul.f32 %v217, %v535
  %v557 = vmul.f32 %v222, %v537
  %v558 = vmul.f32 %v227, %v539
  %v559 = vmul.f32 %v232, %v541
  %v560 = vmul.f32 %v237, %v543
  %v561 = vmul.f32 %v242, %v545
  %v562 = vmul.f32 %v546, %v546
  %v563 = vmul.f32 %v547, %v547
  %v564 = vmul.f32 %v548, %v548
  %v565 = vmul.f32 %v549, %v549
  %v566 = vmul.f32 %v550, %v550
  %v567 = vmul.f32 %v551, %v551
  %v568 = vmul.f32 %v552, %v552
  %v569 = vmul.f32 %v553, %v553
  %v570 = vmul.f32 %v554, %v554
  %v571 = vmul.f32 %v555, %v555
  %v572 = vmul.f32 %v556, %v556
  %v573 = vmul.f32 %v557, %v557
  %v574 = vmul.f32 %v558, %v558
  %v575 = vmul.f32 %v559, %v559
  %v576 = vmul.f32 %v560, %v560
  %v577 = vmul.f32 %v561, %v561
  %v578 = vsel %vm256, %v562, 0.0
  %579 = vadd.xlane.f32.xlu0 %v578
  %v580 = vpop.xlane.xlu0 %579
  %v581 = vsel %vm256, %v563, 0.0
  %582 = vadd.xlane.f32.xlu0 %v581
  %v583 = vpop.xlane.xlu0 %582
  %v584 = vsel %vm256, %v564, 0.0
  %585 = vadd.xlane.f32.xlu0 %v584
  %v586 = vpop.xlane.xlu0 %585
  %v587 = vsel %vm256, %v565, 0.0
  %588 = vadd.xlane.f32.xlu0 %v587
  %v589 = vpop.xlane.xlu0 %588
  %v590 = vsel %vm256, %v566, 0.0
  %591 = vadd.xlane.f32.xlu0 %v590
  %v592 = vpop.xlane.xlu0 %591
  %v593 = vsel %vm256, %v567, 0.0
  %594 = vadd.xlane.f32.xlu0 %v593
  %v595 = vpop.xlane.xlu0 %594
  %v596 = vsel %vm256, %v568, 0.0
  %597 = vadd.xlane.f32.xlu0 %v596
  %v598 = vpop.xlane.xlu0 %597
  %v599 = vsel %vm256, %v569, 0.0
  %600 = vadd.xlane.f32.xlu0 %v599
  %v601 = vpop.xlane.xlu0 %600
  %v602 = vsel %vm256, %v570, 0.0
  %603 = vadd.xlane.f32.xlu0 %v602
  %v604 = vpop.xlane.xlu0 %603
  %v605 = vsel %vm256, %v571, 0.0
  %606 = vadd.xlane.f32.xlu0 %v605
  %v607 = vpop.xlane.xlu0 %606
  %v608 = vsel %vm256, %v572, 0.0
  %609 = vadd.xlane.f32.xlu0 %v608
  %v610 = vpop.xlane.xlu0 %609
  %v611 = vsel %vm256, %v573, 0.0
  %612 = vadd.xlane.f32.xlu0 %v611
  %v613 = vpop.xlane.xlu0 %612
  %v614 = vsel %vm256, %v574, 0.0
  %615 = vadd.xlane.f32.xlu0 %v614
  %v616 = vpop.xlane.xlu0 %615
  %v617 = vsel %vm256, %v575, 0.0
  %618 = vadd.xlane.f32.xlu0 %v617
  %v619 = vpop.xlane.xlu0 %618
  %v620 = vsel %vm256, %v576, 0.0
  %621 = vadd.xlane.f32.xlu0 %v620
  %v622 = vpop.xlane.xlu0 %621
  %v623 = vsel %vm256, %v577, 0.0
  %624 = vadd.xlane.f32.xlu0 %v623
  %v625 = vpop.xlane.xlu0 %624
  %v626 = vmax.f32 %v580, 1e-24
  %v627 = vmax.f32 %v583, 1e-24
  %v628 = vmax.f32 %v586, 1e-24
  %v629 = vmax.f32 %v589, 1e-24
  %v630 = vmax.f32 %v592, 1e-24
  %v631 = vmax.f32 %v595, 1e-24
  %v632 = vmax.f32 %v598, 1e-24
  %v633 = vmax.f32 %v601, 1e-24
  %v634 = vmax.f32 %v604, 1e-24
  %v635 = vmax.f32 %v607, 1e-24
  %v636 = vmax.f32 %v610, 1e-24
  %v637 = vmax.f32 %v613, 1e-24
  %v638 = vmax.f32 %v616, 1e-24
  %v639 = vmax.f32 %v619, 1e-24
  %v640 = vmax.f32 %v622, 1e-24
  %v641 = vmax.f32 %v625, 1e-24
  %v642 = vrsqrt.pop %v626
  %v643 = vrsqrt.pop %v627
  %v644 = vrsqrt.pop %v628
  %v645 = vrsqrt.pop %v629
  %v646 = vrsqrt.pop %v630
  %v647 = vrsqrt.pop %v631
  %v648 = vrsqrt.pop %v632
  %v649 = vrsqrt.pop %v633
  %v650 = vrsqrt.pop %v634
  %v651 = vrsqrt.pop %v635
  %v652 = vrsqrt.pop %v636
  %v653 = vrsqrt.pop %v637
  %v654 = vrsqrt.pop %v638
  %v655 = vrsqrt.pop %v639
  %v656 = vrsqrt.pop %v640
  %v657 = vrsqrt.pop %v641
  %v658 = vmul.f32 %v546, %v642
  %v659 = vmul.f32 %v547, %v643
  %v660 = vmul.f32 %v548, %v644
  %v661 = vmul.f32 %v549, %v645
  %v662 = vmul.f32 %v550, %v646
  %v663 = vmul.f32 %v551, %v647
  %v664 = vmul.f32 %v552, %v648
  %v665 = vmul.f32 %v553, %v649
  %v666 = vmul.f32 %v554, %v650
  %v667 = vmul.f32 %v555, %v651
  %v668 = vmul.f32 %v556, %v652
  %v669 = vmul.f32 %v557, %v653
  %v670 = vmul.f32 %v558, %v654
  %v671 = vmul.f32 %v559, %v655
  %v672 = vmul.f32 %v560, %v656
  %v673 = vmul.f32 %v561, %v657
  %674 = vst.msk [vmem:[%s5] sm:$0xff] %vm256, %v658
  %675 = vst.msk [vmem:[%s5 + $0x8] sm:$0xff] %vm256, %v659
  %676 = vst.msk [vmem:[%s5 + $0x10] sm:$0xff] %vm256, %v660
  %677 = vst.msk [vmem:[%s5 + $0x18] sm:$0xff] %vm256, %v661
  %678 = vst.msk [vmem:[%s5 + $0x20] sm:$0xff] %vm256, %v662
  %679 = vst.msk [vmem:[%s5 + $0x28] sm:$0xff] %vm256, %v663
  %680 = vst.msk [vmem:[%s5 + $0x30] sm:$0xff] %vm256, %v664
  %681 = vst.msk [vmem:[%s5 + $0x38] sm:$0xff] %vm256, %v665
  %682 = vst.msk [vmem:[%s5 + $0x40] sm:$0xff] %vm256, %v666
  %683 = vst.msk [vmem:[%s5 + $0x48] sm:$0xff] %vm256, %v667
  %684 = vst.msk [vmem:[%s5 + $0x50] sm:$0xff] %vm256, %v668
  %685 = vst.msk [vmem:[%s5 + $0x58] sm:$0xff] %vm256, %v669
  %686 = vst.msk [vmem:[%s5 + $0x60] sm:$0xff] %vm256, %v670
  %687 = vst.msk [vmem:[%s5 + $0x68] sm:$0xff] %vm256, %v671
  %688 = vst.msk [vmem:[%s5 + $0x70] sm:$0xff] %vm256, %v672
  %689 = vst.msk [vmem:[%s5 + $0x78] sm:$0xff] %vm256, %v673
  // Predicated region
  $region22: #{tpu_custom_call.1} parent=0 // pred_check
    _
  $region23: #{tpu_custom_call.1} parent=0 // pred_check_branch
    %691 = sbr.rel (0) target = $region25
  $region24: #{tpu_custom_call.1} parent=0 // pred_region
    _
  $region25: #{tpu_custom_call.1} parent=0 // pred_fallthru
    _
  // Predicated region
  $region26: #{tpu_custom_call.1} parent=0 // pred_check
    _
  $region27: #{tpu_custom_call.1} parent=0 // pred_check_branch
    %693 = sbr.rel (0) target = $region29
  $region28: #{tpu_custom_call.1} parent=0 // pred_region
    _
  $region29: #{tpu_custom_call.1} parent=0 // pred_fallthru
    _

// kernel: tpu_custom_call.1
$region0: #{tpu_custom_call.1}
  #allocation0 [shape = 'u32[]', space=smem, size = 0x4, offset = 0x4, fixed_abs, tag = 'smem constant byte address 0x4 - core index']
  #allocation1 [shape = 'u32[144,128]{1,0:T(1,128)}', space=vmem, size = 0x12000, scoped, tag = 'internal scratch']
  %s0 = inlined_call_operand.vmem [shape: f32[128,64], index: 0, kind: input, shape index: {}]
  %s1 = inlined_call_operand.vmem [shape: f32[64,32], index: 1, kind: input, shape index: {}]
  %s2 = inlined_call_operand.vmem [shape: f32[1,32], index: 2, kind: input, shape index: {}]
  %s3 = inlined_call_operand.vmem [shape: f32[32,32], index: 3, kind: input, shape index: {}]
  %s4 = inlined_call_operand.vmem [shape: f32[1,32], index: 4, kind: input, shape index: {}]
  %s5 = inlined_call_operand.vmem [shape: f32[128,32], index: 5, kind: output, shape index: {}]
  %s6 = sld [smem:[#allocation0]]
  $region30: #{tpu_custom_call.1} parent=0
    _
  %s8 = ssub.s32 1, %s6
  %s9 = scalar_select 0, %s8, %s6
  // Predicated region
  $region2: #{tpu_custom_call.1} parent=0 // pred_check
    _
  $region3: #{tpu_custom_call.1} parent=0 // pred_check_branch
    %11 = sbr.rel (0) target = $region5
  $region4: #{tpu_custom_call.1} parent=0 // pred_region
    _
  $region5: #{tpu_custom_call.1} parent=0 // pred_fallthru
    _
  // Predicated region
  $region6: #{tpu_custom_call.1} parent=0 // pred_check
    _
  $region7: #{tpu_custom_call.1} parent=0 // pred_check_branch
    %13 = sbr.rel (0) target = $region9
  $region8: #{tpu_custom_call.1} parent=0 // pred_region
    _
  $region9: #{tpu_custom_call.1} parent=0 // pred_fallthru
    _
  // Predicated region
  $region10: #{tpu_custom_call.1} parent=0 // pred_check
    _
  $region11: #{tpu_custom_call.1} parent=0 // pred_check_branch
    %15 = sbr.rel (0) target = $region13
  $region12: #{tpu_custom_call.1} parent=0 // pred_region
    _
  $region13: #{tpu_custom_call.1} parent=0 // pred_fallthru
    _
  // Predicated region
  $region14: #{tpu_custom_call.1} parent=0 // pred_check
    _
  $region15: #{tpu_custom_call.1} parent=0 // pred_check_branch
    %17 = sbr.rel (0) target = $region17
  $region16: #{tpu_custom_call.1} parent=0 // pred_region
    _
  $region17: #{tpu_custom_call.1} parent=0 // pred_fallthru
    _
  // Predicated region
  $region18: #{tpu_custom_call.1} parent=0 // pred_check
    _
  $region19: #{tpu_custom_call.1} parent=0 // pred_check_branch
    %19 = sbr.rel (0) target = $region21
  $region20: #{tpu_custom_call.1} parent=0 // pred_region
    _
  $region21: #{tpu_custom_call.1} parent=0 // pred_fallthru
    _
  %v20 = vld [vmem:[%s0] sm:$0xff]
  %v21 = vld [vmem:[%s0 + $0x8] sm:$0xff]
  %v22 = vld [vmem:[%s0 + $0x10] sm:$0xff]
  %v23 = vld [vmem:[%s0 + $0x18] sm:$0xff]
  %v24 = vld [vmem:[%s0 + $0x20] sm:$0xff]
  %v25 = vld [vmem:[%s0 + $0x28] sm:$0xff]
  %v26 = vld [vmem:[%s0 + $0x30] sm:$0xff]
  %v27 = vld [vmem:[%s0 + $0x38] sm:$0xff]
  %v28 = vld [vmem:[%s0 + $0x40] sm:$0xff]
  %v29 = vld [vmem:[%s0 + $0x48] sm:$0xff]
  %v30 = vld [vmem:[%s0 + $0x50] sm:$0xff]
  %v31 = vld [vmem:[%s0 + $0x58] sm:$0xff]
  %v32 = vld [vmem:[%s0 + $0x60] sm:$0xff]
  %v33 = vld [vmem:[%s0 + $0x68] sm:$0xff]
  %v34 = vld [vmem:[%s0 + $0x70] sm:$0xff]
  %v35 = vld [vmem:[%s0 + $0x78] sm:$0xff]
  %v36 = vld [vmem:[%s1] sm:$0xff]
  %v37 = vld [vmem:[%s1 + $0x8] sm:$0xff]
  %v38 = vld [vmem:[%s1 + $0x10] sm:$0xff]
  %v39 = vld [vmem:[%s1 + $0x18] sm:$0xff]
  %v40 = vld [vmem:[%s1 + $0x20] sm:$0xff]
  %v41 = vld [vmem:[%s1 + $0x28] sm:$0xff]
  %v42 = vld [vmem:[%s1 + $0x30] sm:$0xff]
  %v43 = vld [vmem:[%s1 + $0x38] sm:$0xff]
  %v44 = vld [vmem:[%s2] sm:$0x1]
  %v46 = vlaneseq
  %v47 = vshrl.u32 %v46, 7
  %v48 = vsub.s32 0, %v47
  %v49 = vrot.slane %v44, %v48
  %vm51 = vcmask 523264
  %v53 = vsel %vm51, %v20, 0
  %v56 = vsel %vm51, %v21, 0
  %v59 = vsel %vm51, %v22, 0
  %v62 = vsel %vm51, %v23, 0
  %v65 = vsel %vm51, %v24, 0
  %v68 = vsel %vm51, %v25, 0
  %v71 = vsel %vm51, %v26, 0
  %v74 = vsel %vm51, %v27, 0
  %v77 = vsel %vm51, %v28, 0
  %v80 = vsel %vm51, %v29, 0
  %v83 = vsel %vm51, %v30, 0
  %v86 = vsel %vm51, %v31, 0
  %v89 = vsel %vm51, %v32, 0
  %v92 = vsel %vm51, %v33, 0
  %v95 = vsel %vm51, %v34, 0
  %v98 = vsel %vm51, %v35, 0
  %100 = vmatprep.subr.mxu0 0.0
  %101 = vmatpush1.msra.mxu0 %v36
  %102 = vmatprep.subr.mxu0 0.0
  %103 = vmatpush1.msra.mxu0 %v37
  %104 = vmatprep.subr.mxu0 0.0
  %105 = vmatpush1.msra.mxu0 %v38
  %106 = vmatprep.subr.mxu0 0.0
  %107 = vmatpush1.msra.mxu0 %v39
  %108 = vmatprep.subr.mxu0 0.0
  %109 = vmatpush1.msra.mxu0 %v40
  %110 = vmatprep.subr.mxu0 0.0
  %111 = vmatpush1.msra.mxu0 %v41
  %112 = vmatprep.subr.mxu0 0.0
  %113 = vmatpush1.msra.mxu0 %v42
  %114 = vmatprep.subr.mxu0 0.0
  %115 = vmatpush1.msra.mxu0 %v43
  %116 = vmatprep.subr.mxu0 0.0
  %117 = vmatpush1.msra.mxu0 0.0
  %118 = vmatprep.subr.mxu0 0.0
  %119 = vmatpush1.msra.mxu0 0.0
  %120 = vmatprep.subr.mxu0 0.0
  %121 = vmatpush1.msra.mxu0 0.0
  %122 = vmatprep.subr.mxu0 0.0
  %123 = vmatpush1.msra.mxu0 0.0
  %124 = vmatprep.subr.mxu0 0.0
  %125 = vmatpush1.msra.mxu0 0.0
  %126 = vmatprep.subr.mxu0 0.0
  %127 = vmatpush1.msra.mxu0 0.0
  %128 = vmatprep.subr.mxu0 0.0
  %129 = vmatpush1.msra.mxu0 0.0
  %130 = vmatprep.subr.mxu0 0.0
  %131 = vmatpush1.msra.mxu0 0.0
  %132 = vmatprep.subr.mxu0 0.0
  %133 = vmatpush1.msra.mxu0 0.0
  %134 = vmatprep.subr.mxu0 0.0
  %135 = vmatpush1.msra.mxu0 0.0
  %136 = vmatprep.subr.mxu0 0.0
  %137 = vmatpush1.msra.mxu0 0.0
  %138 = vmatprep.subr.mxu0 0.0
  %139 = vmatpush1.msra.mxu0 0.0
  %140 = vmatprep.subr.mxu0 0.0
  %141 = vmatpush1.msra.mxu0 0.0
  %142 = vmatprep.subr.mxu0 0.0
  %143 = vmatpush1.msra.mxu0 0.0
  %144 = vmatprep.subr.mxu0 0.0
  %145 = vmatpush1.msra.mxu0 0.0
  %146 = vmatprep.subr.mxu0 0.0
  %147 = vmatpush1.msra.mxu0 0.0
  %148 = vmatprep.subr.mxu0 0.0
  %149 = vmatpush1.msra.mxu0 0.0
  %150 = vmatprep.subr.mxu0 0.0
  %151 = vmatpush1.msra.mxu0 0.0
  %152 = vmatprep.subr.mxu0 0.0
  %153 = vmatpush1.msra.mxu0 0.0
  %154 = vmatprep.subr.mxu0 0.0
  %155 = vmatpush1.msra.mxu0 0.0
  %156 = vmatprep.subr.mxu0 0.0
  %157 = vmatpush1.msra.mxu0 0.0
  %158 = vmatprep.subr.mxu0 0.0
  %159 = vmatpush1.msra.mxu0 0.0
  %160 = vmatprep.subr.mxu0 0.0
  %161 = vmatpush1.msra.mxu0 0.0
  %162 = vmatprep.subr.mxu0 0.0
  %163 = vmatpush1.msra.mxu0 0.0
  %164 = vmatprep.mubr.f32.mxu0 0.0
  %165 = vmatmul.mubr.f32.gmra.mrb[0].mxu0 %v53
  %v166 = vpop.f32.mrb[0].mxu0
  %v167 = vadd.f32 %v49, %v166
  %v168 = vpop.f32.mrb[0].mxu0
  %169 = vmatprep.mubr.f32.mxu0 0.0
  %170 = vmatmul.mubr.f32.gmra.mrb[0].mxu0 %v56
  %v171 = vpop.f32.mrb[0].mxu0
  %v172 = vadd.f32 %v49, %v171
  %v173 = vpop.f32.mrb[0].mxu0
  %174 = vmatprep.mubr.f32.mxu0 0.0
  %175 = vmatmul.mubr.f32.gmra.mrb[0].mxu0 %v59
  %v176 = vpop.f32.mrb[0].mxu0
  %v177 = vadd.f32 %v49, %v176
  %v178 = vpop.f32.mrb[0].mxu0
  %179 = vmatprep.mubr.f32.mxu0 0.0
  %180 = vmatmul.mubr.f32.gmra.mrb[0].mxu0 %v62
  %v181 = vpop.f32.mrb[0].mxu0
  %v182 = vadd.f32 %v49, %v181
  %v183 = vpop.f32.mrb[0].mxu0
  %184 = vmatprep.mubr.f32.mxu0 0.0
  %185 = vmatmul.mubr.f32.gmra.mrb[0].mxu0 %v65
  %v186 = vpop.f32.mrb[0].mxu0
  %v187 = vadd.f32 %v49, %v186
  %v188 = vpop.f32.mrb[0].mxu0
  %189 = vmatprep.mubr.f32.mxu0 0.0
  %190 = vmatmul.mubr.f32.gmra.mrb[0].mxu0 %v68
  %v191 = vpop.f32.mrb[0].mxu0
  %v192 = vadd.f32 %v49, %v191
  %v193 = vpop.f32.mrb[0].mxu0
  %194 = vmatprep.mubr.f32.mxu0 0.0
  %195 = vmatmul.mubr.f32.gmra.mrb[0].mxu0 %v71
  %v196 = vpop.f32.mrb[0].mxu0
  %v197 = vadd.f32 %v49, %v196
  %v198 = vpop.f32.mrb[0].mxu0
  %199 = vmatprep.mubr.f32.mxu0 0.0
  %200 = vmatmul.mubr.f32.gmra.mrb[0].mxu0 %v74
  %v201 = vpop.f32.mrb[0].mxu0
  %v202 = vadd.f32 %v49, %v201
  %v203 = vpop.f32.mrb[0].mxu0
  %204 = vmatprep.mubr.f32.mxu0 0.0
  %205 = vmatmul.mubr.f32.gmra.mrb[0].mxu0 %v77
  %v206 = vpop.f32.mrb[0].mxu0
  %v207 = vadd.f32 %v49, %v206
  %v208 = vpop.f32.mrb[0].mxu0
  %209 = vmatprep.mubr.f32.mxu0 0.0
  %210 = vmatmul.mubr.f32.gmra.mrb[0].mxu0 %v80
  %v211 = vpop.f32.mrb[0].mxu0
  %v212 = vadd.f32 %v49, %v211
  %v213 = vpop.f32.mrb[0].mxu0
  %214 = vmatprep.mubr.f32.mxu0 0.0
  %215 = vmatmul.mubr.f32.gmra.mrb[0].mxu0 %v83
  %v216 = vpop.f32.mrb[0].mxu0
  %v217 = vadd.f32 %v49, %v216
  %v218 = vpop.f32.mrb[0].mxu0
  %219 = vmatprep.mubr.f32.mxu0 0.0
  %220 = vmatmul.mubr.f32.gmra.mrb[0].mxu0 %v86
  %v221 = vpop.f32.mrb[0].mxu0
  %v222 = vadd.f32 %v49, %v221
  %v223 = vpop.f32.mrb[0].mxu0
  %224 = vmatprep.mubr.f32.mxu0 0.0
  %225 = vmatmul.mubr.f32.gmra.mrb[0].mxu0 %v89
  %v226 = vpop.f32.mrb[0].mxu0
  %v227 = vadd.f32 %v49, %v226
  %v228 = vpop.f32.mrb[0].mxu0
  %229 = vmatprep.mubr.f32.mxu0 0.0
  %230 = vmatmul.mubr.f32.gmra.mrb[0].mxu0 %v92
  %v231 = vpop.f32.mrb[0].mxu0
  %v232 = vadd.f32 %v49, %v231
  %v233 = vpop.f32.mrb[0].mxu0
  %234 = vmatprep.mubr.f32.mxu0 0.0
  %235 = vmatmul.mubr.f32.gmra.mrb[0].mxu0 %v95
  %v236 = vpop.f32.mrb[0].mxu0
  %v237 = vadd.f32 %v49, %v236
  %v238 = vpop.f32.mrb[0].mxu0
  %239 = vmatprep.mubr.f32.mxu0 0.0
  %240 = vmatmul.mubr.f32.gmra.mrb[0].mxu0 %v98
  %v241 = vpop.f32.mrb[0].mxu0
  %v242 = vadd.f32 %v49, %v241
  %v243 = vpop.f32.mrb[0].mxu0
  %244 = vdwg.mxu0
  %v245 = vld [vmem:[%s3] sm:$0xff]
  %v246 = vld [vmem:[%s3 + $0x8] sm:$0xff]
  %v247 = vld [vmem:[%s3 + $0x10] sm:$0xff]
  %v248 = vld [vmem:[%s3 + $0x18] sm:$0xff]
  %v249 = vld [vmem:[%s4] sm:$0x1]
  %v251 = vlaneseq
  %v252 = vshrl.u32 %v251, 7
  %v253 = vsub.s32 0, %v252
  %v254 = vrot.slane %v249, %v253
  %vm256 = vcmask 261120
  %v258 = vsel %vm256, %v167, 0
  %v261 = vsel %vm256, %v172, 0
  %v264 = vsel %vm256, %v177, 0
  %v267 = vsel %vm256, %v182, 0
  %v270 = vsel %vm256, %v187, 0
  %v273 = vsel %vm256, %v192, 0
  %v276 = vsel %vm256, %v197, 0
  %v279 = vsel %vm256, %v202, 0
  %v282 = vsel %vm256, %v207, 0
  %v285 = vsel %vm256, %v212, 0
  %v288 = vsel %vm256, %v217, 0
  %v291 = vsel %vm256, %v222, 0
  %v294 = vsel %vm256, %v227, 0
  %v297 = vsel %vm256, %v232, 0
  %v300 = vsel %vm256, %v237, 0
  %v303 = vsel %vm256, %v242, 0
  %305 = vmatprep.subr.mxu0 0.0
  %306 = vmatpush1.msra.mxu0 %v245
  %307 = vmatprep.subr.mxu0 0.0
  %308 = vmatpush1.msra.mxu0 %v246
  %309 = vmatprep.subr.mxu0 0.0
  %310 = vmatpush1.msra.mxu0 %v247
  %311 = vmatprep.subr.mxu0 0.0
  %312 = vmatpush1.msra.mxu0 %v248
  %313 = vmatprep.subr.mxu0 0.0
  %314 = vmatpush1.msra.mxu0 0.0
  %315 = vmatprep.subr.mxu0 0.0
  %316 = vmatpush1.msra.mxu0 0.0
  %317 = vmatprep.subr.mxu0 0.0
  %318 = vmatpush1.msra.mxu0 0.0
  %319 = vmatprep.subr.mxu0 0.0
  %320 = vmatpush1.msra.mxu0 0.0
  %321 = vmatprep.subr.mxu0 0.0
  %322 = vmatpush1.msra.mxu0 0.0
  %323 = vmatprep.subr.mxu0 0.0
  %324 = vmatpush1.msra.mxu0 0.0
  %325 = vmatprep.subr.mxu0 0.0
  %326 = vmatpush1.msra.mxu0 0.0
  %327 = vmatprep.subr.mxu0 0.0
  %328 = vmatpush1.msra.mxu0 0.0
  %329 = vmatprep.subr.mxu0 0.0
  %330 = vmatpush1.msra.mxu0 0.0
  %331 = vmatprep.subr.mxu0 0.0
  %332 = vmatpush1.msra.mxu0 0.0
  %333 = vmatprep.subr.mxu0 0.0
  %334 = vmatpush1.msra.mxu0 0.0
  %335 = vmatprep.subr.mxu0 0.0
  %336 = vmatpush1.msra.mxu0 0.0
  %337 = vmatprep.subr.mxu0 0.0
  %338 = vmatpush1.msra.mxu0 0.0
  %339 = vmatprep.subr.mxu0 0.0
  %340 = vmatpush1.msra.mxu0 0.0
  %341 = vmatprep.subr.mxu0 0.0
  %342 = vmatpush1.msra.mxu0 0.0
  %343 = vmatprep.subr.mxu0 0.0
  %344 = vmatpush1.msra.mxu0 0.0
  %345 = vmatprep.subr.mxu0 0.0
  %346 = vmatpush1.msra.mxu0 0.0
  %347 = vmatprep.subr.mxu0 0.0
  %348 = vmatpush1.msra.mxu0 0.0
  %349 = vmatprep.subr.mxu0 0.0
  %350 = vmatpush1.msra.mxu0 0.0
  %351 = vmatprep.subr.mxu0 0.0
  %352 = vmatpush1.msra.mxu0 0.0
  %353 = vmatprep.subr.mxu0 0.0
  %354 = vmatpush1.msra.mxu0 0.0
  %355 = vmatprep.subr.mxu0 0.0
  %356 = vmatpush1.msra.mxu0 0.0
  %357 = vmatprep.subr.mxu0 0.0
  %358 = vmatpush1.msra.mxu0 0.0
  %359 = vmatprep.subr.mxu0 0.0
  %360 = vmatpush1.msra.mxu0 0.0
  %361 = vmatprep.subr.mxu0 0.0
  %362 = vmatpush1.msra.mxu0 0.0
  %363 = vmatprep.subr.mxu0 0.0
  %364 = vmatpush1.msra.mxu0 0.0
  %365 = vmatprep.subr.mxu0 0.0
  %366 = vmatpush1.msra.mxu0 0.0
  %367 = vmatprep.subr.mxu0 0.0
  %368 = vmatpush1.msra.mxu0 0.0
  %369 = vmatprep.mubr.f32.mxu0 0.0
  %370 = vmatmul.mubr.f32.gmra.mrb[0].mxu0 %v258
  %v371 = vpop.f32.mrb[0].mxu0
  %v372 = vadd.f32 %v254, %v371
  %v373 = vpop.f32.mrb[0].mxu0
  %374 = vmatprep.mubr.f32.mxu0 0.0
  %375 = vmatmul.mubr.f32.gmra.mrb[0].mxu0 %v261
  %v376 = vpop.f32.mrb[0].mxu0
  %v377 = vadd.f32 %v254, %v376
  %v378 = vpop.f32.mrb[0].mxu0
  %379 = vmatprep.mubr.f32.mxu0 0.0
  %380 = vmatmul.mubr.f32.gmra.mrb[0].mxu0 %v264
  %v381 = vpop.f32.mrb[0].mxu0
  %v382 = vadd.f32 %v254, %v381
  %v383 = vpop.f32.mrb[0].mxu0
  %384 = vmatprep.mubr.f32.mxu0 0.0
  %385 = vmatmul.mubr.f32.gmra.mrb[0].mxu0 %v267
  %v386 = vpop.f32.mrb[0].mxu0
  %v387 = vadd.f32 %v254, %v386
  %v388 = vpop.f32.mrb[0].mxu0
  %389 = vmatprep.mubr.f32.mxu0 0.0
  %390 = vmatmul.mubr.f32.gmra.mrb[0].mxu0 %v270
  %v391 = vpop.f32.mrb[0].mxu0
  %v392 = vadd.f32 %v254, %v391
  %v393 = vpop.f32.mrb[0].mxu0
  %394 = vmatprep.mubr.f32.mxu0 0.0
  %395 = vmatmul.mubr.f32.gmra.mrb[0].mxu0 %v273
  %v396 = vpop.f32.mrb[0].mxu0
  %v397 = vadd.f32 %v254, %v396
  %v398 = vpop.f32.mrb[0].mxu0
  %399 = vmatprep.mubr.f32.mxu0 0.0
  %400 = vmatmul.mubr.f32.gmra.mrb[0].mxu0 %v276
  %v401 = vpop.f32.mrb[0].mxu0
  %v402 = vadd.f32 %v254, %v401
  %v403 = vpop.f32.mrb[0].mxu0
  %404 = vmatprep.mubr.f32.mxu0 0.0
  %405 = vmatmul.mubr.f32.gmra.mrb[0].mxu0 %v279
  %v406 = vpop.f32.mrb[0].mxu0
  %v407 = vadd.f32 %v254, %v406
  %v408 = vpop.f32.mrb[0].mxu0
  %409 = vmatprep.mubr.f32.mxu0 0.0
  %410 = vmatmul.mubr.f32.gmra.mrb[0].mxu0 %v282
  %v411 = vpop.f32.mrb[0].mxu0
  %v412 = vadd.f32 %v254, %v411
  %v413 = vpop.f32.mrb[0].mxu0
  %414 = vmatprep.mubr.f32.mxu0 0.0
  %415 = vmatmul.mubr.f32.gmra.mrb[0].mxu0 %v285
  %v416 = vpop.f32.mrb[0].mxu0
  %v417 = vadd.f32 %v254, %v416
  %v418 = vpop.f32.mrb[0].mxu0
  %419 = vmatprep.mubr.f32.mxu0 0.0
  %420 = vmatmul.mubr.f32.gmra.mrb[0].mxu0 %v288
  %v421 = vpop.f32.mrb[0].mxu0
  %v422 = vadd.f32 %v254, %v421
  %v423 = vpop.f32.mrb[0].mxu0
  %424 = vmatprep.mubr.f32.mxu0 0.0
  %425 = vmatmul.mubr.f32.gmra.mrb[0].mxu0 %v291
  %v426 = vpop.f32.mrb[0].mxu0
  %v427 = vadd.f32 %v254, %v426
  %v428 = vpop.f32.mrb[0].mxu0
  %429 = vmatprep.mubr.f32.mxu0 0.0
  %430 = vmatmul.mubr.f32.gmra.mrb[0].mxu0 %v294
  %v431 = vpop.f32.mrb[0].mxu0
  %v432 = vadd.f32 %v254, %v431
  %v433 = vpop.f32.mrb[0].mxu0
  %434 = vmatprep.mubr.f32.mxu0 0.0
  %435 = vmatmul.mubr.f32.gmra.mrb[0].mxu0 %v297
  %v436 = vpop.f32.mrb[0].mxu0
  %v437 = vadd.f32 %v254, %v436
  %v438 = vpop.f32.mrb[0].mxu0
  %439 = vmatprep.mubr.f32.mxu0 0.0
  %440 = vmatmul.mubr.f32.gmra.mrb[0].mxu0 %v300
  %v441 = vpop.f32.mrb[0].mxu0
  %v442 = vadd.f32 %v254, %v441
  %v443 = vpop.f32.mrb[0].mxu0
  %444 = vmatprep.mubr.f32.mxu0 0.0
  %445 = vmatmul.mubr.f32.gmra.mrb[0].mxu0 %v303
  %v446 = vpop.f32.mrb[0].mxu0
  %v447 = vadd.f32 %v254, %v446
  %v448 = vpop.f32.mrb[0].mxu0
  %449 = vdwg.mxu0
  %v450 = vxor.u32 %v372, 2147483648
  %v451 = vxor.u32 %v377, 2147483648
  %v452 = vxor.u32 %v382, 2147483648
  %v453 = vxor.u32 %v387, 2147483648
  %v454 = vxor.u32 %v392, 2147483648
  %v455 = vxor.u32 %v397, 2147483648
  %v456 = vxor.u32 %v402, 2147483648
  %v457 = vxor.u32 %v407, 2147483648
  %v458 = vxor.u32 %v412, 2147483648
  %v459 = vxor.u32 %v417, 2147483648
  %v460 = vxor.u32 %v422, 2147483648
  %v461 = vxor.u32 %v427, 2147483648
  %v462 = vxor.u32 %v432, 2147483648
  %v463 = vxor.u32 %v437, 2147483648
  %v464 = vxor.u32 %v442, 2147483648
  %v465 = vxor.u32 %v447, 2147483648
  %v466 = vmul.f32 %v450, 1.442695
  %v467 = vpow.pop %v466
  %v468 = vmul.f32 %v451, 1.442695
  %v469 = vpow.pop %v468
  %v470 = vmul.f32 %v452, 1.442695
  %v471 = vpow.pop %v470
  %v472 = vmul.f32 %v453, 1.442695
  %v473 = vpow.pop %v472
  %v474 = vmul.f32 %v454, 1.442695
  %v475 = vpow.pop %v474
  %v476 = vmul.f32 %v455, 1.442695
  %v477 = vpow.pop %v476
  %v478 = vmul.f32 %v456, 1.442695
  %v479 = vpow.pop %v478
  %v480 = vmul.f32 %v457, 1.442695
  %v481 = vpow.pop %v480
  %v482 = vmul.f32 %v458, 1.442695
  %v483 = vpow.pop %v482
  %v484 = vmul.f32 %v459, 1.442695
  %v485 = vpow.pop %v484
  %v486 = vmul.f32 %v460, 1.442695
  %v487 = vpow.pop %v486
  %v488 = vmul.f32 %v461, 1.442695
  %v489 = vpow.pop %v488
  %v490 = vmul.f32 %v462, 1.442695
  %v491 = vpow.pop %v490
  %v492 = vmul.f32 %v463, 1.442695
  %v493 = vpow.pop %v492
  %v494 = vmul.f32 %v464, 1.442695
  %v495 = vpow.pop %v494
  %v496 = vmul.f32 %v465, 1.442695
  %v497 = vpow.pop %v496
  %v498 = vadd.f32 %v467, 1.0
  %v499 = vadd.f32 %v469, 1.0
  %v500 = vadd.f32 %v471, 1.0
  %v501 = vadd.f32 %v473, 1.0
  %v502 = vadd.f32 %v475, 1.0
  %v503 = vadd.f32 %v477, 1.0
  %v504 = vadd.f32 %v479, 1.0
  %v505 = vadd.f32 %v481, 1.0
  %v506 = vadd.f32 %v483, 1.0
  %v507 = vadd.f32 %v485, 1.0
  %v508 = vadd.f32 %v487, 1.0
  %v509 = vadd.f32 %v489, 1.0
  %v510 = vadd.f32 %v491, 1.0
  %v511 = vadd.f32 %v493, 1.0
  %v512 = vadd.f32 %v495, 1.0
  %v513 = vadd.f32 %v497, 1.0
  %v514 = vrcp.pop %v498
  %v515 = vmul.f32 1.0, %v514
  %v516 = vrcp.pop %v499
  %v517 = vmul.f32 1.0, %v516
  %v518 = vrcp.pop %v500
  %v519 = vmul.f32 1.0, %v518
  %v520 = vrcp.pop %v501
  %v521 = vmul.f32 1.0, %v520
  %v522 = vrcp.pop %v502
  %v523 = vmul.f32 1.0, %v522
  %v524 = vrcp.pop %v503
  %v525 = vmul.f32 1.0, %v524
  %v526 = vrcp.pop %v504
  %v527 = vmul.f32 1.0, %v526
  %v528 = vrcp.pop %v505
  %v529 = vmul.f32 1.0, %v528
  %v530 = vrcp.pop %v506
  %v531 = vmul.f32 1.0, %v530
  %v532 = vrcp.pop %v507
  %v533 = vmul.f32 1.0, %v532
  %v534 = vrcp.pop %v508
  %v535 = vmul.f32 1.0, %v534
  %v536 = vrcp.pop %v509
  %v537 = vmul.f32 1.0, %v536
  %v538 = vrcp.pop %v510
  %v539 = vmul.f32 1.0, %v538
  %v540 = vrcp.pop %v511
  %v541 = vmul.f32 1.0, %v540
  %v542 = vrcp.pop %v512
  %v543 = vmul.f32 1.0, %v542
  %v544 = vrcp.pop %v513
  %v545 = vmul.f32 1.0, %v544
  %v546 = vmul.f32 %v167, %v515
  %v547 = vmul.f32 %v172, %v517
  %v548 = vmul.f32 %v177, %v519
  %v549 = vmul.f32 %v182, %v521
  %v550 = vmul.f32 %v187, %v523
  %v551 = vmul.f32 %v192, %v525
  %v552 = vmul.f32 %v197, %v527
  %v553 = vmul.f32 %v202, %v529
  %v554 = vmul.f32 %v207, %v531
  %v555 = vmul.f32 %v212, %v533
  %v556 = vmul.f32 %v217, %v535
  %v557 = vmul.f32 %v222, %v537
  %v558 = vmul.f32 %v227, %v539
  %v559 = vmul.f32 %v232, %v541
  %v560 = vmul.f32 %v237, %v543
  %v561 = vmul.f32 %v242, %v545
  %v562 = vmul.f32 %v546, %v546
  %v563 = vmul.f32 %v547, %v547
  %v564 = vmul.f32 %v548, %v548
  %v565 = vmul.f32 %v549, %v549
  %v566 = vmul.f32 %v550, %v550
  %v567 = vmul.f32 %v551, %v551
  %v568 = vmul.f32 %v552, %v552
  %v569 = vmul.f32 %v553, %v553
  %v570 = vmul.f32 %v554, %v554
  %v571 = vmul.f32 %v555, %v555
  %v572 = vmul.f32 %v556, %v556
  %v573 = vmul.f32 %v557, %v557
  %v574 = vmul.f32 %v558, %v558
  %v575 = vmul.f32 %v559, %v559
  %v576 = vmul.f32 %v560, %v560
  %v577 = vmul.f32 %v561, %v561
  %v578 = vsel %vm256, %v562, 0.0
  %579 = vadd.xlane.f32.xlu0 %v578
  %v580 = vpop.xlane.xlu0 %579
  %v581 = vsel %vm256, %v563, 0.0
  %582 = vadd.xlane.f32.xlu0 %v581
  %v583 = vpop.xlane.xlu0 %582
  %v584 = vsel %vm256, %v564, 0.0
  %585 = vadd.xlane.f32.xlu0 %v584
  %v586 = vpop.xlane.xlu0 %585
  %v587 = vsel %vm256, %v565, 0.0
  %588 = vadd.xlane.f32.xlu0 %v587
  %v589 = vpop.xlane.xlu0 %588
  %v590 = vsel %vm256, %v566, 0.0
  %591 = vadd.xlane.f32.xlu0 %v590
  %v592 = vpop.xlane.xlu0 %591
  %v593 = vsel %vm256, %v567, 0.0
  %594 = vadd.xlane.f32.xlu0 %v593
  %v595 = vpop.xlane.xlu0 %594
  %v596 = vsel %vm256, %v568, 0.0
  %597 = vadd.xlane.f32.xlu0 %v596
  %v598 = vpop.xlane.xlu0 %597
  %v599 = vsel %vm256, %v569, 0.0
  %600 = vadd.xlane.f32.xlu0 %v599
  %v601 = vpop.xlane.xlu0 %600
  %v602 = vsel %vm256, %v570, 0.0
  %603 = vadd.xlane.f32.xlu0 %v602
  %v604 = vpop.xlane.xlu0 %603
  %v605 = vsel %vm256, %v571, 0.0
  %606 = vadd.xlane.f32.xlu0 %v605
  %v607 = vpop.xlane.xlu0 %606
  %v608 = vsel %vm256, %v572, 0.0
  %609 = vadd.xlane.f32.xlu0 %v608
  %v610 = vpop.xlane.xlu0 %609
  %v611 = vsel %vm256, %v573, 0.0
  %612 = vadd.xlane.f32.xlu0 %v611
  %v613 = vpop.xlane.xlu0 %612
  %v614 = vsel %vm256, %v574, 0.0
  %615 = vadd.xlane.f32.xlu0 %v614
  %v616 = vpop.xlane.xlu0 %615
  %v617 = vsel %vm256, %v575, 0.0
  %618 = vadd.xlane.f32.xlu0 %v617
  %v619 = vpop.xlane.xlu0 %618
  %v620 = vsel %vm256, %v576, 0.0
  %621 = vadd.xlane.f32.xlu0 %v620
  %v622 = vpop.xlane.xlu0 %621
  %v623 = vsel %vm256, %v577, 0.0
  %624 = vadd.xlane.f32.xlu0 %v623
  %v625 = vpop.xlane.xlu0 %624
  %v626 = vmax.f32 %v580, 1e-24
  %v627 = vmax.f32 %v583, 1e-24
  %v628 = vmax.f32 %v586, 1e-24
  %v629 = vmax.f32 %v589, 1e-24
  %v630 = vmax.f32 %v592, 1e-24
  %v631 = vmax.f32 %v595, 1e-24
  %v632 = vmax.f32 %v598, 1e-24
  %v633 = vmax.f32 %v601, 1e-24
  %v634 = vmax.f32 %v604, 1e-24
  %v635 = vmax.f32 %v607, 1e-24
  %v636 = vmax.f32 %v610, 1e-24
  %v637 = vmax.f32 %v613, 1e-24
  %v638 = vmax.f32 %v616, 1e-24
  %v639 = vmax.f32 %v619, 1e-24
  %v640 = vmax.f32 %v622, 1e-24
  %v641 = vmax.f32 %v625, 1e-24
  %v642 = vrsqrt.pop %v626
  %v643 = vrsqrt.pop %v627
  %v644 = vrsqrt.pop %v628
  %v645 = vrsqrt.pop %v629
  %v646 = vrsqrt.pop %v630
  %v647 = vrsqrt.pop %v631
  %v648 = vrsqrt.pop %v632
  %v649 = vrsqrt.pop %v633
  %v650 = vrsqrt.pop %v634
  %v651 = vrsqrt.pop %v635
  %v652 = vrsqrt.pop %v636
  %v653 = vrsqrt.pop %v637
  %v654 = vrsqrt.pop %v638
  %v655 = vrsqrt.pop %v639
  %v656 = vrsqrt.pop %v640
  %v657 = vrsqrt.pop %v641
  %v658 = vmul.f32 %v546, %v642
  %v659 = vmul.f32 %v547, %v643
  %v660 = vmul.f32 %v548, %v644
  %v661 = vmul.f32 %v549, %v645
  %v662 = vmul.f32 %v550, %v646
  %v663 = vmul.f32 %v551, %v647
  %v664 = vmul.f32 %v552, %v648
  %v665 = vmul.f32 %v553, %v649
  %v666 = vmul.f32 %v554, %v650
  %v667 = vmul.f32 %v555, %v651
  %v668 = vmul.f32 %v556, %v652
  %v669 = vmul.f32 %v557, %v653
  %v670 = vmul.f32 %v558, %v654
  %v671 = vmul.f32 %v559, %v655
  %v672 = vmul.f32 %v560, %v656
  %v673 = vmul.f32 %v561, %v657
  %674 = vst.msk [vmem:[%s5] sm:$0xff] %vm256, %v658
  %675 = vst.msk [vmem:[%s5 + $0x8] sm:$0xff] %vm256, %v659
  %676 = vst.msk [vmem:[%s5 + $0x10] sm:$0xff] %vm256, %v660
  %677 = vst.msk [vmem:[%s5 + $0x18] sm:$0xff] %vm256, %v661
  %678 = vst.msk [vmem:[%s5 + $0x20] sm:$0xff] %vm256, %v662
  %679 = vst.msk [vmem:[%s5 + $0x28] sm:$0xff] %vm256, %v663
  %680 = vst.msk [vmem:[%s5 + $0x30] sm:$0xff] %vm256, %v664
  %681 = vst.msk [vmem:[%s5 + $0x38] sm:$0xff] %vm256, %v665
  %682 = vst.msk [vmem:[%s5 + $0x40] sm:$0xff] %vm256, %v666
  %683 = vst.msk [vmem:[%s5 + $0x48] sm:$0xff] %vm256, %v667
  %684 = vst.msk [vmem:[%s5 + $0x50] sm:$0xff] %vm256, %v668
  %685 = vst.msk [vmem:[%s5 + $0x58] sm:$0xff] %vm256, %v669
  %686 = vst.msk [vmem:[%s5 + $0x60] sm:$0xff] %vm256, %v670
  %687 = vst.msk [vmem:[%s5 + $0x68] sm:$0xff] %vm256, %v671
  %688 = vst.msk [vmem:[%s5 + $0x70] sm:$0xff] %vm256, %v672
  %689 = vst.msk [vmem:[%s5 + $0x78] sm:$0xff] %vm256, %v673
  // Predicated region
  $region22: #{tpu_custom_call.1} parent=0 // pred_check
    _
  $region23: #{tpu_custom_call.1} parent=0 // pred_check_branch
    %691 = sbr.rel (0) target = $region25
  $region24: #{tpu_custom_call.1} parent=0 // pred_region
    _
  $region25: #{tpu_custom_call.1} parent=0 // pred_fallthru
    _
  // Predicated region
  $region26: #{tpu_custom_call.1} parent=0 // pred_check
    _
  $region27: #{tpu_custom_call.1} parent=0 // pred_check_branch
    %693 = sbr.rel (0) target = $region29
  $region28: #{tpu_custom_call.1} parent=0 // pred_region
    _
  $region29: #{tpu_custom_call.1} parent=0 // pred_fallthru
    _

</llo_original>
